<compile_context>
chip_gen: v6e
topology: v6e:2x2x1
jax: 0.10.0
libtpu: 0.0.40
codegen_flags: <defaults>
</compile_context>

<pallas_src>
import jax
import jax.numpy as jnp
from jax import lax
from jax.experimental import pallas as pl
from jax.experimental.pallas import tpu as pltpu

# TODO(synk): Pointnet2Backbone (FPS + ball-query set abstraction / feature
#             propagation) is not defined in the provided source; fp2_xyz /
#             fp2_features are synthesized as kernel inputs.
# TODO(synk): ProposalModule / LangModule (GRU) / MatchModule are not defined
#             in the provided source and are omitted.


def _voting_kernel(xyz_ref, feat_ref,
                   w1_ref, t1_ref, w2_ref, t2_ref, w3_ref, b3_ref,
                   vote_xyz_ref, vote_feat_ref):
    """One lane tile of B*N points per grid step.

    VotingModule (vote_factor=1, BN scale pre-folded into weights) followed by
    RefNet's channel-wise L2 normalization of the vote features.
    """
    C = feat_ref.shape[0]

    # conv1 (1x1, BN1 scale folded into weight) + BN1 shift + ReLU
    h = jnp.maximum(
        jnp.dot(w1_ref[...], feat_ref[...], preferred_element_type=jnp.float32)
        + t1_ref[...], 0.0)

    # conv2 (1x1, BN2 scale folded into weight) + BN2 shift + ReLU
    h = jnp.maximum(
        jnp.dot(w2_ref[...], h, preferred_element_type=jnp.float32)
        + t2_ref[...], 0.0)

    # conv3 as ONE padded matmul: rows 0..2 = xyz offset, rows 8..8+C = residual
    y = jnp.dot(w3_ref[...], h, preferred_element_type=jnp.float32) + b3_ref[...]

    # vote xyz = seed xyz + predicted offset
    vote_xyz_ref[...] = xyz_ref[...] + y[0:3, :]

    # vote features = seed features + residual, then L2-normalize over channels
    # (re-read seed features from VMEM here so they aren't live across matmuls)
    vf = feat_ref[...] + y[8:8 + C, :]
    inv = lax.rsqrt(jnp.sum(vf * vf, axis=0, keepdims=True))  # EUP rsqrt
    # NOTE: matches the PyTorch norm+div (no epsilon); zero vectors -> NaN/Inf.
    vote_feat_ref[...] = vf * inv


def refnet_vote_and_normalize(seed_xyz, seed_features, kparams, lane_tile=128):
    """seed_xyz: (B, N, 3) f32; seed_features: (B, C, N) f32."""
    B, N, _ = seed_xyz.shape
    C = seed_features.shape[1]
    P = B * N
    assert lane_tile % 128 == 0 and P % lane_tile == 0

    w1f, t1, w2f, t2, w3p, b3p = kparams

    # Flatten batch into the point/lane axis (1x1 convs share weights over B).
    xyz_flat = jnp.transpose(seed_xyz, (2, 0, 1)).reshape(3, P)          # (3, B*N)
    feat_flat = jnp.transpose(seed_features, (1, 0, 2)).reshape(C, P)    # (C, B*N)

    const = lambda shp: pl.BlockSpec(shp, lambda i: (0, 0))  # resident weights

    vote_xyz_flat, vote_feat_flat = pl.pallas_call(
        _voting_kernel,
        out_shape=(jax.ShapeDtypeStruct((3, P), jnp.float32),
                   jax.ShapeDtypeStruct((C, P), jnp.float32)),
        grid_spec=pltpu.PrefetchScalarGridSpec(
            num_scalar_prefetch=0,
            grid=(P // lane_tile,),
            in_specs=[
                pl.BlockSpec((3, lane_tile), lambda i: (0, i)),   # seed xyz
                pl.BlockSpec((C, lane_tile), lambda i: (0, i)),   # seed features
                const((C, C)), const((C, 1)),                     # conv1 (+BN1)
                const((C, C)), const((C, 1)),                     # conv2 (+BN2)
                const((8 + C, C)), const((8 + C, 1)),             # padded conv3
            ],
            out_specs=(pl.BlockSpec((3, lane_tile), lambda i: (0, i)),
                       pl.BlockSpec((C, lane_tile), lambda i: (0, i))),
        ),
        compiler_params=pltpu.CompilerParams(
            dimension_semantics=("parallel",)),
    )(xyz_flat, feat_flat, w1f, t1, w2f, t2, w3p, b3p)

    vote_xyz = jnp.transpose(vote_xyz_flat.reshape(3, B, N), (1, 2, 0))   # (B,N,3)
    vote_feat = jnp.transpose(vote_feat_flat.reshape(C, B, N), (1, 0, 2)) # (B,C,N)
    return vote_xyz, vote_feat


def fold_params(raw):
    """Host-side prep: fold eval-mode BN into conv weights, pad conv3 to 8+C rows."""
    (w1, b1, g1, be1, m1, v1,
     w2, b2, g2, be2, m2, v2,
     w3, b3, eps) = raw
    C = w1.shape[0]

    s1 = g1 / jnp.sqrt(v1 + eps)
    s2 = g2 / jnp.sqrt(v2 + eps)
    w1f = w1 * s1[:, None]                                   # (C, C)
    t1 = (s1 * b1 + (be1 - m1 * s1))[:, None]                # (C, 1)
    w2f = w2 * s2[:, None]
    t2 = (s2 * b2 + (be2 - m2 * s2))[:, None]

    # Pad conv3 weight/bias to (8 + C, ...): xyz rows -> sublanes 0..2,
    # feature rows start at sublane 8 so the in-kernel split is 8-aligned.
    w3p = jnp.zeros((8 + C, C), jnp.float32)
    w3p = w3p.at[0:3].set(w3[:3]).at[8:8 + C].set(w3[3:])
    b3p = jnp.zeros((8 + C, 1), jnp.float32)
    b3p = b3p.at[0:3, 0].set(b3[:3]).at[8:8 + C, 0].set(b3[3:])
    return (w1f, t1, w2f, t2, w3p, b3p)


def init_raw_params(key, C=256):
    """Deterministic raw parameters for VotingModule(vote_factor=1, seed_dim=C)."""
    ks = jax.random.split(key, 10)
    scale = 0.02
    w1 = scale * jax.random.normal(ks[0], (C, C), jnp.float32)
    b1 = scale * jax.random.normal(ks[1], (C,), jnp.float32)
    w2 = scale * jax.random.normal(ks[2], (C, C), jnp.float32)
    b2 = scale * jax.random.normal(ks[3], (C,), jnp.float32)
    w3 = scale * jax.random.normal(ks[4], (3 + C, C), jnp.float32)
    b3 = scale * jax.random.normal(ks[5], (3 + C,), jnp.float32)

    # eval-mode BatchNorm params (deterministic, non-trivial)
    g1 = 1.0 + 0.1 * jax.random.normal(ks[6], (C,), jnp.float32)
    be1 = 0.1 * jax.random.normal(ks[7], (C,), jnp.float32)
    g2 = 1.0 + 0.1 * jax.random.normal(ks[8], (C,), jnp.float32)
    be2 = 0.1 * jax.random.normal(ks[9], (C,), jnp.float32)
    m1 = jnp.zeros((C,), jnp.float32); v1 = jnp.ones((C,), jnp.float32)
    m2 = jnp.zeros((C,), jnp.float32); v2 = jnp.ones((C,), jnp.float32)
    eps = 1e-5
    return (w1, b1, g1, be1, m1, v1, w2, b2, g2, be2, m2, v2, w3, b3, eps)


def _reference(seed_xyz, seed_features, raw):
    """Pure-JAX reference of the original (unfolded) conv+BN+ReLU math."""
    (w1, b1, g1, be1, m1, v1,
     w2, b2, g2, be2, m2, v2,
     w3, b3, eps) = raw

    def bn(x, g, be, m, v):
        s = g / jnp.sqrt(v + eps)
        return x * s[None, :, None] + (be - m * s)[None, :, None]

    x = seed_features                                              # (B, C, N)
    h = jnp.einsum('oc,bcn->bon', w1, x) + b1[None, :, None]
    h = jnp.maximum(bn(h, g1, be1, m1, v1), 0.0)
    h = jnp.einsum('oc,bcn->bon', w2, h) + b2[None, :, None]
    h = jnp.maximum(bn(h, g2, be2, m2, v2), 0.0)
    y = jnp.einsum('oc,bcn->bon', w3, h) + b3[None, :, None]
    off = y[:, :3]                                                 # (B, 3, N)
    res = y[:, 3:]                                                 # (B, C, N)
    vote_xyz = seed_xyz + jnp.transpose(off, (0, 2, 1))            # (B, N, 3)
    vf = x + res
    vf = vf / jnp.sqrt(jnp.sum(vf * vf, axis=1, keepdims=True))
    return vote_xyz, vf


if __name__ == "__main__":
    B, N, C = 2, 128, 256   # C=256 fixed by RefNet (VotingModule(vote_factor, 256))
    key = jax.random.PRNGKey(0)
    k_xyz, k_feat, k_par = jax.random.split(key, 3)

    # synthesized backbone outputs (fp2_xyz, fp2_features)
    seed_xyz = jax.random.normal(k_xyz, (B, N, 3), jnp.float32)
    seed_features = jax.random.normal(k_feat, (B, C, N), jnp.float32)
    raw_params = init_raw_params(k_par, C)
    kparams = fold_params(raw_params)

    # lane_tile=128 -> B*N/128 = 2 "parallel" grid steps (keeps both v7x TCs busy)
    vote_xyz, vote_feat = refnet_vote_and_normalize(
        seed_xyz, seed_features, kparams, lane_tile=128)
    jax.block_until_ready((vote_xyz, vote_feat))

    ref_xyz, ref_feat = _reference(seed_xyz, seed_features, raw_params)
    assert jnp.allclose(vote_xyz, ref_xyz, rtol=1e-4, atol=1e-4)
    assert jnp.allclose(vote_feat, ref_feat, rtol=1e-4, atol=1e-4)

    print("KERNEL_OK")
</pallas_src>

<mosaic_0001>
module attributes {stable_mosaic.version = 11 : i64} {
  func.func @_voting_kernel(%arg0: i32, %arg1: memref<3x128xf32, #tpu.memory_space<vmem>>, %arg2: memref<256x128xf32, #tpu.memory_space<vmem>>, %arg3: memref<256x256xf32, #tpu.memory_space<vmem>>, %arg4: memref<256x1xf32, #tpu.memory_space<vmem>>, %arg5: memref<256x256xf32, #tpu.memory_space<vmem>>, %arg6: memref<256x1xf32, #tpu.memory_space<vmem>>, %arg7: memref<264x256xf32, #tpu.memory_space<vmem>>, %arg8: memref<264x1xf32, #tpu.memory_space<vmem>>, %arg9: memref<3x128xf32, #tpu.memory_space<vmem>>, %arg10: memref<256x128xf32, #tpu.memory_space<vmem>>) attributes {dimension_semantics = [#tpu.dimension_semantics<parallel>], iteration_bounds = array<i64: 2>, scalar_prefetch = 0 : i64, scratch_operands = 0 : i64, tpu.core_type = #tpu.core_type<tc>, window_params = [{transform_indices = @transform_0, window_bounds = array<i64: 3, 128>}, {transform_indices = @transform_1, window_bounds = array<i64: 256, 128>}, {pipeline_mode = #tpu.pipeline_mode<synchronous>, transform_indices = @transform_2, window_bounds = array<i64: 256, 256>}, {pipeline_mode = #tpu.pipeline_mode<synchronous>, transform_indices = @transform_3, window_bounds = array<i64: 256, 1>}, {pipeline_mode = #tpu.pipeline_mode<synchronous>, transform_indices = @transform_4, window_bounds = array<i64: 256, 256>}, {pipeline_mode = #tpu.pipeline_mode<synchronous>, transform_indices = @transform_5, window_bounds = array<i64: 256, 1>}, {pipeline_mode = #tpu.pipeline_mode<synchronous>, transform_indices = @transform_6, window_bounds = array<i64: 264, 256>}, {pipeline_mode = #tpu.pipeline_mode<synchronous>, transform_indices = @transform_7, window_bounds = array<i64: 264, 1>}, {transform_indices = @transform_8, window_bounds = array<i64: 3, 128>}, {transform_indices = @transform_9, window_bounds = array<i64: 256, 128>}]} {
    %c0 = arith.constant 0 : index
    %c0_0 = arith.constant 0 : index
    %0 = vector.load %arg3[%c0, %c0_0] : memref<256x256xf32, #tpu.memory_space<vmem>>, vector<256x256xf32>
    %c0_1 = arith.constant 0 : index
    %c0_2 = arith.constant 0 : index
    %1 = vector.load %arg2[%c0_1, %c0_2] : memref<256x128xf32, #tpu.memory_space<vmem>>, vector<256x128xf32>
    %cst = arith.constant dense<0.000000e+00> : vector<256x128xf32>
    %2 = tpu.matmul %0, %1, %cst {dimension_numbers = #tpu.dot_dimension_numbers<[1], [0], [0], [1], [0, 0, 1, 1], [], []>} : vector<256x256xf32>, vector<256x128xf32>, vector<256x128xf32> -> vector<256x128xf32>
    %c0_3 = arith.constant 0 : index
    %c0_4 = arith.constant 0 : index
    %3 = vector.load %arg4[%c0_3, %c0_4] : memref<256x1xf32, #tpu.memory_space<vmem>>, vector<256x1xf32>
    %4 = vector.broadcast %3 : vector<256x1xf32> to vector<256x128xf32>
    %5 = arith.addf %2, %4 : vector<256x128xf32>
    %cst_5 = arith.constant 0.000000e+00 : f32
    %6 = vector.broadcast %cst_5 : f32 to vector<256x128xf32>
    %7 = arith.maximumf %5, %6 : vector<256x128xf32>
    %c0_6 = arith.constant 0 : index
    %c0_7 = arith.constant 0 : index
    %8 = vector.load %arg5[%c0_6, %c0_7] : memref<256x256xf32, #tpu.memory_space<vmem>>, vector<256x256xf32>
    %cst_8 = arith.constant dense<0.000000e+00> : vector<256x128xf32>
    %9 = tpu.matmul %8, %7, %cst_8 {dimension_numbers = #tpu.dot_dimension_numbers<[1], [0], [0], [1], [0, 0, 1, 1], [], []>} : vector<256x256xf32>, vector<256x128xf32>, vector<256x128xf32> -> vector<256x128xf32>
    %c0_9 = arith.constant 0 : index
    %c0_10 = arith.constant 0 : index
    %10 = vector.load %arg6[%c0_9, %c0_10] : memref<256x1xf32, #tpu.memory_space<vmem>>, vector<256x1xf32>
    %11 = vector.broadcast %10 : vector<256x1xf32> to vector<256x128xf32>
    %12 = arith.addf %9, %11 : vector<256x128xf32>
    %cst_11 = arith.constant 0.000000e+00 : f32
    %13 = vector.broadcast %cst_11 : f32 to vector<256x128xf32>
    %14 = arith.maximumf %12, %13 : vector<256x128xf32>
    %c0_12 = arith.constant 0 : index
    %c0_13 = arith.constant 0 : index
    %15 = vector.load %arg7[%c0_12, %c0_13] : memref<264x256xf32, #tpu.memory_space<vmem>>, vector<264x256xf32>
    %cst_14 = arith.constant dense<0.000000e+00> : vector<264x128xf32>
    %16 = tpu.matmul %15, %14, %cst_14 {dimension_numbers = #tpu.dot_dimension_numbers<[1], [0], [0], [1], [0, 0, 1, 1], [], []>} : vector<264x256xf32>, vector<256x128xf32>, vector<264x128xf32> -> vector<264x128xf32>
    %c0_15 = arith.constant 0 : index
    %c0_16 = arith.constant 0 : index
    %17 = vector.load %arg8[%c0_15, %c0_16] : memref<264x1xf32, #tpu.memory_space<vmem>>, vector<264x1xf32>
    %18 = vector.broadcast %17 : vector<264x1xf32> to vector<264x128xf32>
    %19 = arith.addf %16, %18 : vector<264x128xf32>
    %c0_17 = arith.constant 0 : index
    %c0_18 = arith.constant 0 : index
    %20 = vector.load %arg1[%c0_17, %c0_18] : memref<3x128xf32, #tpu.memory_space<vmem>>, vector<3x128xf32>
    %21 = vector.extract_strided_slice %19 {offsets = [0, 0], sizes = [3, 128], strides = [1, 1]} : vector<264x128xf32> to vector<3x128xf32>
    %22 = arith.addf %20, %21 : vector<3x128xf32>
    %c0_19 = arith.constant 0 : index
    %c0_20 = arith.constant 0 : index
    %23 = vector.load %arg9[%c0_19, %c0_20] : memref<3x128xf32, #tpu.memory_space<vmem>>, vector<3x128xf32>
    tpu.vector_store %arg9[%c0_19, %c0_20], %22 {strides = array<i32>} : memref<3x128xf32, #tpu.memory_space<vmem>>, vector<3x128xf32>,
    %c0_21 = arith.constant 0 : index
    %c0_22 = arith.constant 0 : index
    %24 = vector.load %arg2[%c0_21, %c0_22] : memref<256x128xf32, #tpu.memory_space<vmem>>, vector<256x128xf32>
    %25 = vector.extract_strided_slice %19 {offsets = [8, 0], sizes = [256, 128], strides = [1, 1]} : vector<264x128xf32> to vector<256x128xf32>
    %26 = arith.addf %24, %25 : vector<256x128xf32>
    %27 = arith.mulf %26, %26 : vector<256x128xf32>
    %cst_23 = arith.constant dense<0.000000e+00> : vector<128xf32>
    %28 = vector.multi_reduction <add>, %27, %cst_23 [0] : vector<256x128xf32> to vector<128xf32>
    %29 = vector.shape_cast %28 : vector<128xf32> to vector<1x128xf32>
    %30 = math.rsqrt %29 : vector<1x128xf32>
    %31 = vector.broadcast %30 : vector<1x128xf32> to vector<256x128xf32>
    %32 = arith.mulf %26, %31 : vector<256x128xf32>
    %c0_24 = arith.constant 0 : index
    %c0_25 = arith.constant 0 : index
    %33 = vector.load %arg10[%c0_24, %c0_25] : memref<256x128xf32, #tpu.memory_space<vmem>>, vector<256x128xf32>
    tpu.vector_store %arg10[%c0_24, %c0_25], %32 {strides = array<i32>} : memref<256x128xf32, #tpu.memory_space<vmem>>, vector<256x128xf32>,
    return
  }
  func.func @transform_0(%arg0: i32) -> (i32, i32) {
    %c0_i32 = arith.constant 0 : i32
    %c0_i32_0 = arith.constant 0 : i32
    return %c0_i32, %arg0 : i32, i32
  }
  func.func @transform_1(%arg0: i32) -> (i32, i32) {
    %c0_i32 = arith.constant 0 : i32
    %c0_i32_0 = arith.constant 0 : i32
    return %c0_i32, %arg0 : i32, i32
  }
  func.func @transform_2(%arg0: i32) -> (i32, i32) {
    %c0_i32 = arith.constant 0 : i32
    %c0_i32_0 = arith.constant 0 : i32
    %c0_i32_1 = arith.constant 0 : i32
    return %c0_i32, %c0_i32_0 : i32, i32
  }
  func.func @transform_3(%arg0: i32) -> (i32, i32) {
    %c0_i32 = arith.constant 0 : i32
    %c0_i32_0 = arith.constant 0 : i32
    %c0_i32_1 = arith.constant 0 : i32
    return %c0_i32, %c0_i32_0 : i32, i32
  }
  func.func @transform_4(%arg0: i32) -> (i32, i32) {
    %c0_i32 = arith.constant 0 : i32
    %c0_i32_0 = arith.constant 0 : i32
    %c0_i32_1 = arith.constant 0 : i32
    return %c0_i32, %c0_i32_0 : i32, i32
  }
  func.func @transform_5(%arg0: i32) -> (i32, i32) {
    %c0_i32 = arith.constant 0 : i32
    %c0_i32_0 = arith.constant 0 : i32
    %c0_i32_1 = arith.constant 0 : i32
    return %c0_i32, %c0_i32_0 : i32, i32
  }
  func.func @transform_6(%arg0: i32) -> (i32, i32) {
    %c0_i32 = arith.constant 0 : i32
    %c0_i32_0 = arith.constant 0 : i32
    %c0_i32_1 = arith.constant 0 : i32
    return %c0_i32, %c0_i32_0 : i32, i32
  }
  func.func @transform_7(%arg0: i32) -> (i32, i32) {
    %c0_i32 = arith.constant 0 : i32
    %c0_i32_0 = arith.constant 0 : i32
    %c0_i32_1 = arith.constant 0 : i32
    return %c0_i32, %c0_i32_0 : i32, i32
  }
  func.func @transform_8(%arg0: i32) -> (i32, i32) {
    %c0_i32 = arith.constant 0 : i32
    %c0_i32_0 = arith.constant 0 : i32
    return %c0_i32, %arg0 : i32, i32
  }
  func.func @transform_9(%arg0: i32) -> (i32, i32) {
    %c0_i32 = arith.constant 0 : i32
    %c0_i32_0 = arith.constant 0 : i32
    return %c0_i32, %arg0 : i32, i32
  }
}

</mosaic_0001>

<llo_original>
// kernel: tpu_custom_call.1
$region0: #{tpu_custom_call.1}
  #allocation0 [shape = 'u32[]', space=smem, size = 0x4, offset = 0x4, fixed_abs, tag = 'smem constant byte address 0x4 - core index']
  #allocation1 [shape = 'u32[144,128]{1,0:T(1,128)}', space=vmem, size = 0x12000, scoped, tag = 'internal scratch']
  %s0 = inlined_call_operand.vmem [shape: f32[3,256], index: 0, kind: input, shape index: {}]
  %s1 = inlined_call_operand.hbm [shape: f32[256,256], index: 1, kind: input, shape index: {}]
  %s2 = inlined_call_operand.hbm [shape: f32[256,256], index: 2, kind: input, shape index: {}]
  %s3 = inlined_call_operand.vmem [shape: f32[256,1], index: 3, kind: input, shape index: {}]
  %s4 = inlined_call_operand.hbm [shape: f32[256,256], index: 4, kind: input, shape index: {}]
  %s5 = inlined_call_operand.vmem [shape: f32[256,1], index: 5, kind: input, shape index: {}]
  %s6 = inlined_call_operand.vmem [shape: f32[264,256], index: 6, kind: input, shape index: {}]
  %s7 = inlined_call_operand.vmem [shape: f32[264,1], index: 7, kind: input, shape index: {}]
  %s8 = inlined_call_operand.hbm [shape: f32[3,256], index: 8, kind: output, shape index: {0}]
  %s9 = inlined_call_operand.hbm [shape: f32[256,256], index: 9, kind: output, shape index: {1}]
  %10 = xla_tuple %s8, %s9
  %s11 = sld [smem:[#allocation0]]
  $region85: #{tpu_custom_call.1} parent=0
    _
  %s13 = ssub.s32 1, %s11
  %s14 = scalar_select 0, %s13, %s11
  $region1: #{tpu_custom_call.1} parent=0
    #allocation2 [shape = 'u8[262144]{0}', space=vmem, size = 0x40000, scoped, tag = 'input window, operand 1']
    #allocation3 [shape = 's32[2]{0}', space=sflag, size = 0x8, scoped, tag = 'scoped memory for tpu_custom_call.1']
    #allocation4 [shape = 's32[2]{0}', space=sflag, size = 0x8, scoped, tag = 'scoped memory for tpu_custom_call.1']
    #allocation5 [shape = 'u8[262144]{0}', space=vmem, size = 0x40000, scoped, tag = 'input window, operand 2, single buffered']
    #allocation6 [shape = 's32[1]{0}', space=sflag, size = 0x4, scoped, tag = 'scoped memory for tpu_custom_call.1']
    #allocation7 [shape = 'u8[262144]{0}', space=vmem, size = 0x40000, scoped, tag = 'input window, operand 4, single buffered']
    #allocation8 [shape = 'u8[4096]{0}', space=vmem, size = 0x1000, scoped, tag = 'output window, operand 0']
    #allocation9 [shape = 'u8[262144]{0}', space=vmem, size = 0x40000, scoped, tag = 'output window, operand 1']
    #allocation10 [shape = 's32[2]{0}', space=sflag, size = 0x8, scoped, tag = 'scoped memory for tpu_custom_call.1']
    %15 = vsyncpa [#allocation3], 0
    %s16 = scalar_lea.sflag [#allocation3], 1
    %17 = vsyncpa %s16, 0
    %18 = vsyncpa [#allocation6], 0
    %19 = vsyncpa [#allocation4], 0
    %s20 = scalar_lea.sflag [#allocation4], 1
    %21 = vsyncpa %s20, 0
    %22 = vsyncpa [#allocation10], 0
    %s23 = scalar_lea.sflag [#allocation10], 1
    %24 = vsyncpa %s23, 0
    loop: start=0, step=1, limit=4
    $region2: #{tpu_custom_call.1} parent=1 // loop_pre_header
      _
    $region3: #{tpu_custom_call.1} parent=1 // loop_header
      %s26 = sphi 0, %s30
      %p27 = scmp.ge.s32.totalorder %s26, 4
      %s36 = sphi 0, %s38
      %s39 = sphi 0, %s36
      %s40 = sphi 0, %s39
      %s56 = sphi 0, %s40
      %s62 = sphi 0, %s64
      %s65 = sphi 0, %s62
      %s66 = sphi 0, %s65
      %s82 = sphi 0, %s66
      %s86 = sphi 0, %s86
      %s88 = sphi 0, %s86
      %s89 = sphi 0, %s88
      %s103 = sphi 0, %s89
      %s107 = sphi 0, %s107
      %s109 = sphi 0, %s107
      %s110 = sphi 0, %s109
      %s124 = sphi 0, %s110
      %s128 = sphi 0, %s128
      %s130 = sphi 0, %s128
      %s131 = sphi 0, %s130
      %s145 = sphi 0, %s131
      %s149 = sphi 0, %s149
      %s151 = sphi 0, %s149
      %s152 = sphi 0, %s151
      %s166 = sphi 0, %s152
      %s170 = sphi 0, %s170
      %s172 = sphi 0, %s170
      %s173 = sphi 0, %s172
      %s187 = sphi 0, %s173
      %s191 = sphi 0, %s191
      %s193 = sphi 0, %s191
      %s194 = sphi 0, %s193
      %s208 = sphi 0, %s194
      %s214 = sphi 0, %s216
      %s217 = sphi 0, %s214
      %s218 = sphi 0, %s217
      %s234 = sphi 0, %s218
      %s240 = sphi 0, %s242
      %s243 = sphi 0, %s240
      %s244 = sphi 0, %s243
      %s260 = sphi 0, %s244
    $region4: #{tpu_custom_call.1} parent=1 // loop_header_branch
      %29 = sbr.rel (%p27) target = $region8
    $region5: #{tpu_custom_call.1} parent=1 // loop_body
      %s31 = ssub.s32 %s26, 1
      %s32 = ssub.s32 %s26, 2
      %s33 = sadd.s32 %s26, 1
      %s34 = ssub.s32 %s26, %s33
      %p35 = scmp.eq.s32.totalorder %s34, 0
      %s37 = sadd.s32 %s36, 1
      %s38 = scalar_select %p35, %s36, %s37
      %p41 = pneg %p35
      %p42 = scmp.eq.s32.totalorder %s26, 1
      %p43 = por %p41, %p42
      %p44 = scmp.ne.s32.totalorder %s36, %s39
      %p45 = scmp.eq.s32.totalorder %s26, 0
      %p46 = por %p44, %p45
      %p47 = scmp.ne.s32.totalorder %s36, %s39
      %p48 = scmp.eq.s32.totalorder %s31, 1
      %p49 = por %p47, %p48
      %p50 = scmp.ne.s32.totalorder %s39, %s40
      %p51 = scmp.eq.s32.totalorder %s31, 0
      %p52 = por %p50, %p51
      %p53 = scmp.ne.s32.totalorder %s39, %s40
      %p54 = scmp.eq.s32.totalorder %s32, 1
      %p55 = por %p53, %p54
      %p57 = scmp.ne.s32.totalorder %s40, %s56
      %p58 = scmp.eq.s32.totalorder %s32, 0
      %p59 = por %p57, %p58
      %s60 = ssub.s32 %s26, %s33
      %p61 = scmp.eq.s32.totalorder %s60, 0
      %s63 = sadd.s32 %s62, 1
      %s64 = scalar_select %p61, %s62, %s63
      %p67 = pneg %p61
      %p68 = scmp.eq.s32.totalorder %s26, 1
      %p69 = por %p67, %p68
      %p70 = scmp.ne.s32.totalorder %s62, %s65
      %p71 = scmp.eq.s32.totalorder %s26, 0
      %p72 = por %p70, %p71
      %p73 = scmp.ne.s32.totalorder %s62, %s65
      %p74 = scmp.eq.s32.totalorder %s31, 1
      %p75 = por %p73, %p74
      %p76 = scmp.ne.s32.totalorder %s65, %s66
      %p77 = scmp.eq.s32.totalorder %s31, 0
      %p78 = por %p76, %p77
      %p79 = scmp.ne.s32.totalorder %s65, %s66
      %p80 = scmp.eq.s32.totalorder %s32, 1
      %p81 = por %p79, %p80
      %p83 = scmp.ne.s32.totalorder %s66, %s82
      %p84 = scmp.eq.s32.totalorder %s32, 0
      %p85 = por %p83, %p84
      %s87 = sadd.s32 %s86, 1
      %p90 = scmp.eq.s32.totalorder %s26, 1
      %p91 = scmp.ne.s32.totalorder %s86, %s88
      %p92 = scmp.eq.s32.totalorder %s26, 0
      %p93 = por %p91, %p92
      %p94 = scmp.ne.s32.totalorder %s86, %s88
      %p95 = scmp.eq.s32.totalorder %s31, 1
      %p96 = por %p94, %p95
      %p97 = scmp.ne.s32.totalorder %s88, %s89
      %p98 = scmp.eq.s32.totalorder %s31, 0
      %p99 = por %p97, %p98
      %p100 = scmp.ne.s32.totalorder %s88, %s89
      %p101 = scmp.eq.s32.totalorder %s32, 1
      %p102 = por %p100, %p101
      %p104 = scmp.ne.s32.totalorder %s89, %s103
      %p105 = scmp.eq.s32.totalorder %s32, 0
      %p106 = por %p104, %p105
      %s108 = sadd.s32 %s107, 1
      %p111 = scmp.eq.s32.totalorder %s26, 1
      %p112 = scmp.ne.s32.totalorder %s107, %s109
      %p113 = scmp.eq.s32.totalorder %s26, 0
      %p114 = por %p112, %p113
      %p115 = scmp.ne.s32.totalorder %s107, %s109
      %p116 = scmp.eq.s32.totalorder %s31, 1
      %p117 = por %p115, %p116
      %p118 = scmp.ne.s32.totalorder %s109, %s110
      %p119 = scmp.eq.s32.totalorder %s31, 0
      %p120 = por %p118, %p119
      %p121 = scmp.ne.s32.totalorder %s109, %s110
      %p122 = scmp.eq.s32.totalorder %s32, 1
      %p123 = por %p121, %p122
      %p125 = scmp.ne.s32.totalorder %s110, %s124
      %p126 = scmp.eq.s32.totalorder %s32, 0
      %p127 = por %p125, %p126
      %s129 = sadd.s32 %s128, 1
      %p132 = scmp.eq.s32.totalorder %s26, 1
      %p133 = scmp.ne.s32.totalorder %s128, %s130
      %p134 = scmp.eq.s32.totalorder %s26, 0
      %p135 = por %p133, %p134
      %p136 = scmp.ne.s32.totalorder %s128, %s130
      %p137 = scmp.eq.s32.totalorder %s31, 1
      %p138 = por %p136, %p137
      %p139 = scmp.ne.s32.totalorder %s130, %s131
      %p140 = scmp.eq.s32.totalorder %s31, 0
      %p141 = por %p139, %p140
      %p142 = scmp.ne.s32.totalorder %s130, %s131
      %p143 = scmp.eq.s32.totalorder %s32, 1
      %p144 = por %p142, %p143
      %p146 = scmp.ne.s32.totalorder %s131, %s145
      %p147 = scmp.eq.s32.totalorder %s32, 0
      %p148 = por %p146, %p147
      %s150 = sadd.s32 %s149, 1
      %p153 = scmp.eq.s32.totalorder %s26, 1
      %p154 = scmp.ne.s32.totalorder %s149, %s151
      %p155 = scmp.eq.s32.totalorder %s26, 0
      %p156 = por %p154, %p155
      %p157 = scmp.ne.s32.totalorder %s149, %s151
      %p158 = scmp.eq.s32.totalorder %s31, 1
      %p159 = por %p157, %p158
      %p160 = scmp.ne.s32.totalorder %s151, %s152
      %p161 = scmp.eq.s32.totalorder %s31, 0
      %p162 = por %p160, %p161
      %p163 = scmp.ne.s32.totalorder %s151, %s152
      %p164 = scmp.eq.s32.totalorder %s32, 1
      %p165 = por %p163, %p164
      %p167 = scmp.ne.s32.totalorder %s152, %s166
      %p168 = scmp.eq.s32.totalorder %s32, 0
      %p169 = por %p167, %p168
      %s171 = sadd.s32 %s170, 1
      %p174 = scmp.eq.s32.totalorder %s26, 1
      %p175 = scmp.ne.s32.totalorder %s170, %s172
      %p176 = scmp.eq.s32.totalorder %s26, 0
      %p177 = por %p175, %p176
      %p178 = scmp.ne.s32.totalorder %s170, %s172
      %p179 = scmp.eq.s32.totalorder %s31, 1
      %p180 = por %p178, %p179
      %p181 = scmp.ne.s32.totalorder %s172, %s173
      %p182 = scmp.eq.s32.totalorder %s31, 0
      %p183 = por %p181, %p182
      %p184 = scmp.ne.s32.totalorder %s172, %s173
      %p185 = scmp.eq.s32.totalorder %s32, 1
      %p186 = por %p184, %p185
      %p188 = scmp.ne.s32.totalorder %s173, %s187
      %p189 = scmp.eq.s32.totalorder %s32, 0
      %p190 = por %p188, %p189
      %s192 = sadd.s32 %s191, 1
      %p195 = scmp.eq.s32.totalorder %s26, 1
      %p196 = scmp.ne.s32.totalorder %s191, %s193
      %p197 = scmp.eq.s32.totalorder %s26, 0
      %p198 = por %p196, %p197
      %p199 = scmp.ne.s32.totalorder %s191, %s193
      %p200 = scmp.eq.s32.totalorder %s31, 1
      %p201 = por %p199, %p200
      %p202 = scmp.ne.s32.totalorder %s193, %s194
      %p203 = scmp.eq.s32.totalorder %s31, 0
      %p204 = por %p202, %p203
      %p205 = scmp.ne.s32.totalorder %s193, %s194
      %p206 = scmp.eq.s32.totalorder %s32, 1
      %p207 = por %p205, %p206
      %p209 = scmp.ne.s32.totalorder %s194, %s208
      %p210 = scmp.eq.s32.totalorder %s32, 0
      %p211 = por %p209, %p210
      %s212 = ssub.s32 %s26, %s33
      %p213 = scmp.eq.s32.totalorder %s212, 0
      %s215 = sadd.s32 %s214, 1
      %s216 = scalar_select %p213, %s214, %s215
      %p219 = pneg %p213
      %p220 = scmp.eq.s32.totalorder %s26, 1
      %p221 = por %p219, %p220
      %p222 = scmp.ne.s32.totalorder %s214, %s217
      %p223 = scmp.eq.s32.totalorder %s26, 0
      %p224 = por %p222, %p223
      %p225 = scmp.ne.s32.totalorder %s214, %s217
      %p226 = scmp.eq.s32.totalorder %s31, 1
      %p227 = por %p225, %p226
      %p228 = scmp.ne.s32.totalorder %s217, %s218
      %p229 = scmp.eq.s32.totalorder %s31, 0
      %p230 = por %p228, %p229
      %p231 = scmp.ne.s32.totalorder %s217, %s218
      %p232 = scmp.eq.s32.totalorder %s32, 1
      %p233 = por %p231, %p232
      %p235 = scmp.ne.s32.totalorder %s218, %s234
      %p236 = scmp.eq.s32.totalorder %s32, 0
      %p237 = por %p235, %p236
      %s238 = ssub.s32 %s26, %s33
      %p239 = scmp.eq.s32.totalorder %s238, 0
      %s241 = sadd.s32 %s240, 1
      %s242 = scalar_select %p239, %s240, %s241
      %p245 = pneg %p239
      %p246 = scmp.eq.s32.totalorder %s26, 1
      %p247 = por %p245, %p246
      %p248 = scmp.ne.s32.totalorder %s240, %s243
      %p249 = scmp.eq.s32.totalorder %s26, 0
      %p250 = por %p248, %p249
      %p251 = scmp.ne.s32.totalorder %s240, %s243
      %p252 = scmp.eq.s32.totalorder %s31, 1
      %p253 = por %p251, %p252
      %p254 = scmp.ne.s32.totalorder %s243, %s244
      %p255 = scmp.eq.s32.totalorder %s31, 0
      %p256 = por %p254, %p255
      %p257 = scmp.ne.s32.totalorder %s243, %s244
      %p258 = scmp.eq.s32.totalorder %s32, 1
      %p259 = por %p257, %p258
      %p261 = scmp.ne.s32.totalorder %s244, %s260
      %p262 = scmp.eq.s32.totalorder %s32, 0
      %p263 = por %p261, %p262
      %p264 = scmp.le.s32.totalorder 1, %s26
      %p265 = scmp.lt.s32.totalorder %s26, 3
      %p266 = pnand %p264, %p265
      %p267 = pneg %p266
      // Predicated region
      $region9: #{tpu_custom_call.1} parent=5 // pred_check
        _
      $region10: #{tpu_custom_call.1} parent=5 // pred_check_branch
        %269 = sbr.rel (%p266) target = $region12
      $region11: #{tpu_custom_call.1} parent=5 // pred_region
        %s270 = ssub.s32 %s26, 1
        // Predicated region
        $region13: #{tpu_custom_call.1} parent=11 // pred_check
          %p271 = pneg %p99
        $region14: #{tpu_custom_call.1} parent=11 // pred_check_branch
          %273 = sbr.rel (%p271) target = $region16
        $region15: #{tpu_custom_call.1} parent=11 // pred_region
          %s275 = ssub.s32 8192, 8192
          %276 = vsyncadd [#allocation6], %s275
          %s277 = sshll.u32 [#allocation5], 4
          %s278 = int_to_ptr.vmem [resolvable:$true] %s277
          %283 = dma.hbm_to_vmem [thread:$0]  %s2, 8192, %s278, [#allocation6], 256, 256, 16
        $region16: #{tpu_custom_call.1} parent=11 // pred_fallthru
          _
        // Predicated region
        $region17: #{tpu_custom_call.1} parent=11 // pred_check
          %p284 = pneg %p120
        $region18: #{tpu_custom_call.1} parent=11 // pred_check_branch
          %286 = sbr.rel (%p284) target = $region20
        $region19: #{tpu_custom_call.1} parent=11 // pred_region
          _
        $region20: #{tpu_custom_call.1} parent=11 // pred_fallthru
          _
        // Predicated region
        $region21: #{tpu_custom_call.1} parent=11 // pred_check
          %p287 = pneg %p141
        $region22: #{tpu_custom_call.1} parent=11 // pred_check_branch
          %289 = sbr.rel (%p287) target = $region24
        $region23: #{tpu_custom_call.1} parent=11 // pred_region
          %s291 = ssub.s32 8192, 8192
          %292 = vsyncadd [#allocation6], %s291
          %s293 = sshll.u32 [#allocation7], 4
          %s294 = int_to_ptr.vmem [resolvable:$true] %s293
          %299 = dma.hbm_to_vmem [thread:$0]  %s4, 8192, %s294, [#allocation6], 256, 256, 16
        $region24: #{tpu_custom_call.1} parent=11 // pred_fallthru
          _
        // Predicated region
        $region25: #{tpu_custom_call.1} parent=11 // pred_check
          %p300 = pneg %p162
        $region26: #{tpu_custom_call.1} parent=11 // pred_check_branch
          %302 = sbr.rel (%p300) target = $region28
        $region27: #{tpu_custom_call.1} parent=11 // pred_region
          _
        $region28: #{tpu_custom_call.1} parent=11 // pred_fallthru
          _
        // Predicated region
        $region29: #{tpu_custom_call.1} parent=11 // pred_check
          %p303 = pneg %p183
        $region30: #{tpu_custom_call.1} parent=11 // pred_check_branch
          %305 = sbr.rel (%p303) target = $region32
        $region31: #{tpu_custom_call.1} parent=11 // pred_region
          _
        $region32: #{tpu_custom_call.1} parent=11 // pred_fallthru
          _
        // Predicated region
        $region33: #{tpu_custom_call.1} parent=11 // pred_check
          %p306 = pneg %p204
        $region34: #{tpu_custom_call.1} parent=11 // pred_check_branch
          %308 = sbr.rel (%p306) target = $region36
        $region35: #{tpu_custom_call.1} parent=11 // pred_region
          _
        $region36: #{tpu_custom_call.1} parent=11 // pred_fallthru
          _
      $region12: #{tpu_custom_call.1} parent=5 // pred_fallthru
        _
      %p309 = scmp.lt.s32.totalorder %s26, 2
      // Predicated region
      $region37: #{tpu_custom_call.1} parent=5 // pred_check
        %p310 = pneg %p309
      $region38: #{tpu_custom_call.1} parent=5 // pred_check_branch
        %312 = sbr.rel (%p310) target = $region40
      $region39: #{tpu_custom_call.1} parent=5 // pred_region
        // Predicated region
        $region41: #{tpu_custom_call.1} parent=39 // pred_check
          %p313 = pneg %p46
        $region42: #{tpu_custom_call.1} parent=39 // pred_check_branch
          %315 = sbr.rel (%p313) target = $region44
        $region43: #{tpu_custom_call.1} parent=39 // pred_region
          %p316 = scmp.lt.s32.totalorder %s26, 1
          %s317 = scalar_select %p316, %s26, 1
          %s318 = smul.addr %s317, 4
          %s319 = scalar_lea.vmem %s0, %s318
        $region44: #{tpu_custom_call.1} parent=39 // pred_fallthru
          _
        // Predicated region
        $region45: #{tpu_custom_call.1} parent=39 // pred_check
          %p320 = pneg %p72
        $region46: #{tpu_custom_call.1} parent=39 // pred_check_branch
          %322 = sbr.rel (%p320) target = $region48
        $region47: #{tpu_custom_call.1} parent=39 // pred_region
          %s323 = sand.u32 %s62, 1
          %s324 = scalar_lea.sflag [#allocation3], %s323
          %s325 = sand.u32 %s62, 1
          %s326 = smul.addr %s325, 256
          %s327 = scalar_lea.vmem [#allocation2], %s326
          %s329 = ssub.s32 4096, 4096
          %330 = vsyncadd %s324, %s329
          %s331 = smul.addr %s26, 128
          %s332 = scalar_lea.hbm %s1, %s331
          %s333 = sshll.u32 %s327, 4
          %s334 = int_to_ptr.vmem [resolvable:$true] %s333
          %339 = dma.hbm_to_vmem [thread:$0]  %s332, 4096, %s334, %s324, 256, 128, 8
        $region48: #{tpu_custom_call.1} parent=39 // pred_fallthru
          _
      $region40: #{tpu_custom_call.1} parent=5 // pred_fallthru
        _
      %p340 = scmp.le.s32.totalorder 1, %s26
      %p341 = scmp.lt.s32.totalorder %s26, 3
      %p342 = pnand %p340, %p341
      %p343 = pneg %p342
      // Predicated region
      $region49: #{tpu_custom_call.1} parent=5 // pred_check
        _
      $region50: #{tpu_custom_call.1} parent=5 // pred_check_branch
        %345 = sbr.rel (%p342) target = $region52
      $region51: #{tpu_custom_call.1} parent=5 // pred_region
        %s346 = ssub.s32 %s26, 1
        %s347 = sand.u32 %s65, 1
        %s348 = scalar_lea.sflag [#allocation3], %s347
        %s349 = sand.u32 %s65, 1
        %s350 = smul.addr %s349, 256
        %s351 = scalar_lea.vmem [#allocation2], %s350
        // Predicated region
        $region53: #{tpu_custom_call.1} parent=51 // pred_check
          %p352 = pneg %p78
        $region54: #{tpu_custom_call.1} parent=51 // pred_check_branch
          %354 = sbr.rel (%p352) target = $region56
        $region55: #{tpu_custom_call.1} parent=51 // pred_region
          %355 = dma.done %s348, 4096
        $region56: #{tpu_custom_call.1} parent=51 // pred_fallthru
          _
        // Predicated region
        $region57: #{tpu_custom_call.1} parent=51 // pred_check
          %p356 = pneg %p99
        $region58: #{tpu_custom_call.1} parent=51 // pred_check_branch
          %358 = sbr.rel (%p356) target = $region60
        $region59: #{tpu_custom_call.1} parent=51 // pred_region
          %359 = dma.done [#allocation6], 8192
        $region60: #{tpu_custom_call.1} parent=51 // pred_fallthru
          _
        // Predicated region
        $region61: #{tpu_custom_call.1} parent=51 // pred_check
          %p360 = pneg %p141
        $region62: #{tpu_custom_call.1} parent=51 // pred_check_branch
          %362 = sbr.rel (%p360) target = $region64
        $region63: #{tpu_custom_call.1} parent=51 // pred_region
          %363 = dma.done [#allocation6], 8192
        $region64: #{tpu_custom_call.1} parent=51 // pred_fallthru
          _
        %p364 = scmp.lt.s32.totalorder %s31, 1
        %s365 = scalar_select %p364, %s31, 1
        %s366 = smul.addr %s365, 4
        %s367 = scalar_lea.vmem %s0, %s366
        %p368 = pneg %p52
        %p369 = pneg %p49
        %s370 = sand.u32 %s65, 1
        %s371 = scalar_lea.sflag [#allocation3], %s370
        %s372 = sand.u32 %s65, 1
        %s373 = smul.addr %s372, 256
        %s374 = scalar_lea.vmem [#allocation2], %s373
        %p375 = pneg %p78
        %p376 = pneg %p75
        %p377 = pneg %p99
        %p378 = pneg %p96
        %p379 = pneg %p120
        %p380 = pneg %p117
        %p381 = pneg %p141
        %p382 = pneg %p138
        %p383 = pneg %p162
        %p384 = pneg %p159
        %p385 = pneg %p183
        %p386 = pneg %p180
        %p387 = pneg %p204
        %p388 = pneg %p201
        %p389 = pneg %p230
        %p390 = pneg %p227
        %s391 = sand.u32 %s217, 1
        %s392 = scalar_lea.sflag [#allocation4], %s391
        %s393 = sand.u32 %s217, 1
        %s394 = smul.addr %s393, 4
        %s395 = scalar_lea.vmem [#allocation8], %s394
        %p396 = pneg %p256
        %p397 = pneg %p253
        %s398 = sand.u32 %s243, 1
        %s399 = scalar_lea.sflag [#allocation10], %s398
        %s400 = sand.u32 %s243, 1
        %s401 = smul.addr %s400, 256
        %s402 = scalar_lea.vmem [#allocation9], %s401
        %p403 = scmp.lt.s32.totalorder %s31, 1
        %s404 = scalar_select %p403, %s31, 1
        %s405 = smul.addr %s404, 4
        %s406 = scalar_lea.vmem %s0, %s405
        %v407 = vld [vmem:[#allocation5] sm:$0xff]
        %v408 = vld [vmem:[#allocation5 + $0x8] sm:$0xff]
        %v409 = vld [vmem:[#allocation5 + $0x10] sm:$0xff]
        %v410 = vld [vmem:[#allocation5 + $0x18] sm:$0xff]
        %v411 = vld [vmem:[#allocation5 + $0x20] sm:$0xff]
        %v412 = vld [vmem:[#allocation5 + $0x28] sm:$0xff]
        %v413 = vld [vmem:[#allocation5 + $0x30] sm:$0xff]
        %v414 = vld [vmem:[#allocation5 + $0x38] sm:$0xff]
        %v415 = vld [vmem:[#allocation5 + $0x40] sm:$0xff]
        %v416 = vld [vmem:[#allocation5 + $0x48] sm:$0xff]
        %v417 = vld [vmem:[#allocation5 + $0x50] sm:$0xff]
        %v418 = vld [vmem:[#allocation5 + $0x58] sm:$0xff]
        %v419 = vld [vmem:[#allocation5 + $0x60] sm:$0xff]
        %v420 = vld [vmem:[#allocation5 + $0x68] sm:$0xff]
        %v421 = vld [vmem:[#allocation5 + $0x70] sm:$0xff]
        %v422 = vld [vmem:[#allocation5 + $0x78] sm:$0xff]
        %v423 = vld [vmem:[#allocation5 + $0x80] sm:$0xff]
        %v424 = vld [vmem:[#allocation5 + $0x88] sm:$0xff]
        %v425 = vld [vmem:[#allocation5 + $0x90] sm:$0xff]
        %v426 = vld [vmem:[#allocation5 + $0x98] sm:$0xff]
        %v427 = vld [vmem:[#allocation5 + $0xa0] sm:$0xff]
        %v428 = vld [vmem:[#allocation5 + $0xa8] sm:$0xff]
        %v429 = vld [vmem:[#allocation5 + $0xb0] sm:$0xff]
        %v430 = vld [vmem:[#allocation5 + $0xb8] sm:$0xff]
        %v431 = vld [vmem:[#allocation5 + $0xc0] sm:$0xff]
        %v432 = vld [vmem:[#allocation5 + $0xc8] sm:$0xff]
        %v433 = vld [vmem:[#allocation5 + $0xd0] sm:$0xff]
        %v434 = vld [vmem:[#allocation5 + $0xd8] sm:$0xff]
        %v435 = vld [vmem:[#allocation5 + $0xe0] sm:$0xff]
        %v436 = vld [vmem:[#allocation5 + $0xe8] sm:$0xff]
        %v437 = vld [vmem:[#allocation5 + $0xf0] sm:$0xff]
        %v438 = vld [vmem:[#allocation5 + $0xf8] sm:$0xff]
        %v439 = vld [vmem:[#allocation5 + $0x100] sm:$0xff]
        %v440 = vld [vmem:[#allocation5 + $0x108] sm:$0xff]
        %v441 = vld [vmem:[#allocation5 + $0x110] sm:$0xff]
        %v442 = vld [vmem:[#allocation5 + $0x118] sm:$0xff]
        %v443 = vld [vmem:[#allocation5 + $0x120] sm:$0xff]
        %v444 = vld [vmem:[#allocation5 + $0x128] sm:$0xff]
        %v445 = vld [vmem:[#allocation5 + $0x130] sm:$0xff]
        %v446 = vld [vmem:[#allocation5 + $0x138] sm:$0xff]
        %v447 = vld [vmem:[#allocation5 + $0x140] sm:$0xff]
        %v448 = vld [vmem:[#allocation5 + $0x148] sm:$0xff]
        %v449 = vld [vmem:[#allocation5 + $0x150] sm:$0xff]
        %v450 = vld [vmem:[#allocation5 + $0x158] sm:$0xff]
        %v451 = vld [vmem:[#allocation5 + $0x160] sm:$0xff]
        %v452 = vld [vmem:[#allocation5 + $0x168] sm:$0xff]
        %v453 = vld [vmem:[#allocation5 + $0x170] sm:$0xff]
        %v454 = vld [vmem:[#allocation5 + $0x178] sm:$0xff]
        %v455 = vld [vmem:[#allocation5 + $0x180] sm:$0xff]
        %v456 = vld [vmem:[#allocation5 + $0x188] sm:$0xff]
        %v457 = vld [vmem:[#allocation5 + $0x190] sm:$0xff]
        %v458 = vld [vmem:[#allocation5 + $0x198] sm:$0xff]
        %v459 = vld [vmem:[#allocation5 + $0x1a0] sm:$0xff]
        %v460 = vld [vmem:[#allocation5 + $0x1a8] sm:$0xff]
        %v461 = vld [vmem:[#allocation5 + $0x1b0] sm:$0xff]
        %v462 = vld [vmem:[#allocation5 + $0x1b8] sm:$0xff]
        %v463 = vld [vmem:[#allocation5 + $0x1c0] sm:$0xff]
        %v464 = vld [vmem:[#allocation5 + $0x1c8] sm:$0xff]
        %v465 = vld [vmem:[#allocation5 + $0x1d0] sm:$0xff]
        %v466 = vld [vmem:[#allocation5 + $0x1d8] sm:$0xff]
        %v467 = vld [vmem:[#allocation5 + $0x1e0] sm:$0xff]
        %v468 = vld [vmem:[#allocation5 + $0x1e8] sm:$0xff]
        %v469 = vld [vmem:[#allocation5 + $0x1f0] sm:$0xff]
        %v470 = vld [vmem:[#allocation5 + $0x1f8] sm:$0xff]
        %v471 = vld [vmem:[%s351] sm:$0xff]
        %v472 = vld [vmem:[%s351 + $0x8] sm:$0xff]
        %v473 = vld [vmem:[%s351 + $0x10] sm:$0xff]
        %v474 = vld [vmem:[%s351 + $0x18] sm:$0xff]
        %v475 = vld [vmem:[%s351 + $0x20] sm:$0xff]
        %v476 = vld [vmem:[%s351 + $0x28] sm:$0xff]
        %v477 = vld [vmem:[%s351 + $0x30] sm:$0xff]
        %v478 = vld [vmem:[%s351 + $0x38] sm:$0xff]
        %v479 = vld [vmem:[%s351 + $0x40] sm:$0xff]
        %v480 = vld [vmem:[%s351 + $0x48] sm:$0xff]
        %v481 = vld [vmem:[%s351 + $0x50] sm:$0xff]
        %v482 = vld [vmem:[%s351 + $0x58] sm:$0xff]
        %v483 = vld [vmem:[%s351 + $0x60] sm:$0xff]
        %v484 = vld [vmem:[%s351 + $0x68] sm:$0xff]
        %v485 = vld [vmem:[%s351 + $0x70] sm:$0xff]
        %v486 = vld [vmem:[%s351 + $0x78] sm:$0xff]
        %v487 = vld [vmem:[%s351 + $0x80] sm:$0xff]
        %v488 = vld [vmem:[%s351 + $0x88] sm:$0xff]
        %v489 = vld [vmem:[%s351 + $0x90] sm:$0xff]
        %v490 = vld [vmem:[%s351 + $0x98] sm:$0xff]
        %v491 = vld [vmem:[%s351 + $0xa0] sm:$0xff]
        %v492 = vld [vmem:[%s351 + $0xa8] sm:$0xff]
        %v493 = vld [vmem:[%s351 + $0xb0] sm:$0xff]
        %v494 = vld [vmem:[%s351 + $0xb8] sm:$0xff]
        %v495 = vld [vmem:[%s351 + $0xc0] sm:$0xff]
        %v496 = vld [vmem:[%s351 + $0xc8] sm:$0xff]
        %v497 = vld [vmem:[%s351 + $0xd0] sm:$0xff]
        %v498 = vld [vmem:[%s351 + $0xd8] sm:$0xff]
        %v499 = vld [vmem:[%s351 + $0xe0] sm:$0xff]
        %v500 = vld [vmem:[%s351 + $0xe8] sm:$0xff]
        %v501 = vld [vmem:[%s351 + $0xf0] sm:$0xff]
        %v502 = vld [vmem:[%s351 + $0xf8] sm:$0xff]
        %v503 = vld [vmem:[%s3] sm:$0xff]
        %v504 = vld [vmem:[%s3 + $0x8] sm:$0xff]
        %v505 = vld [vmem:[%s3 + $0x10] sm:$0xff]
        %v506 = vld [vmem:[%s3 + $0x18] sm:$0xff]
        %v507 = vld [vmem:[%s3 + $0x20] sm:$0xff]
        %v508 = vld [vmem:[%s3 + $0x28] sm:$0xff]
        %v509 = vld [vmem:[%s3 + $0x30] sm:$0xff]
        %v510 = vld [vmem:[%s3 + $0x38] sm:$0xff]
        %v511 = vld [vmem:[%s3 + $0x40] sm:$0xff]
        %v512 = vld [vmem:[%s3 + $0x48] sm:$0xff]
        %v513 = vld [vmem:[%s3 + $0x50] sm:$0xff]
        %v514 = vld [vmem:[%s3 + $0x58] sm:$0xff]
        %v515 = vld [vmem:[%s3 + $0x60] sm:$0xff]
        %v516 = vld [vmem:[%s3 + $0x68] sm:$0xff]
        %v517 = vld [vmem:[%s3 + $0x70] sm:$0xff]
        %v518 = vld [vmem:[%s3 + $0x78] sm:$0xff]
        %v519 = vld [vmem:[%s3 + $0x80] sm:$0xff]
        %v520 = vld [vmem:[%s3 + $0x88] sm:$0xff]
        %v521 = vld [vmem:[%s3 + $0x90] sm:$0xff]
        %v522 = vld [vmem:[%s3 + $0x98] sm:$0xff]
        %v523 = vld [vmem:[%s3 + $0xa0] sm:$0xff]
        %v524 = vld [vmem:[%s3 + $0xa8] sm:$0xff]
        %v525 = vld [vmem:[%s3 + $0xb0] sm:$0xff]
        %v526 = vld [vmem:[%s3 + $0xb8] sm:$0xff]
        %v527 = vld [vmem:[%s3 + $0xc0] sm:$0xff]
        %v528 = vld [vmem:[%s3 + $0xc8] sm:$0xff]
        %v529 = vld [vmem:[%s3 + $0xd0] sm:$0xff]
        %v530 = vld [vmem:[%s3 + $0xd8] sm:$0xff]
        %v531 = vld [vmem:[%s3 + $0xe0] sm:$0xff]
        %v532 = vld [vmem:[%s3 + $0xe8] sm:$0xff]
        %v533 = vld [vmem:[%s3 + $0xf0] sm:$0xff]
        %v534 = vld [vmem:[%s3 + $0xf8] sm:$0xff]
        %536 = vset.pattern.permute.xlu0 0
        %537 = vperm.xlu0 %536, %v503
        %v538 = vpop.permute.xlu0 %537
        %541 = vset.pattern.permute.xlu0 0
        %542 = vperm.xlu0 %541, %v504
        %v543 = vpop.permute.xlu0 %542
        %546 = vset.pattern.permute.xlu0 0
        %547 = vperm.xlu0 %546, %v505
        %v548 = vpop.permute.xlu0 %547
        %551 = vset.pattern.permute.xlu0 0
        %552 = vperm.xlu0 %551, %v506
        %v553 = vpop.permute.xlu0 %552
        %556 = vset.pattern.permute.xlu0 0
        %557 = vperm.xlu0 %556, %v507
        %v558 = vpop.permute.xlu0 %557
        %561 = vset.pattern.permute.xlu0 0
        %562 = vperm.xlu0 %561, %v508
        %v563 = vpop.permute.xlu0 %562
        %566 = vset.pattern.permute.xlu0 0
        %567 = vperm.xlu0 %566, %v509
        %v568 = vpop.permute.xlu0 %567
        %571 = vset.pattern.permute.xlu0 0
        %572 = vperm.xlu0 %571, %v510
        %v573 = vpop.permute.xlu0 %572
        %576 = vset.pattern.permute.xlu0 0
        %577 = vperm.xlu0 %576, %v511
        %v578 = vpop.permute.xlu0 %577
        %581 = vset.pattern.permute.xlu0 0
        %582 = vperm.xlu0 %581, %v512
        %v583 = vpop.permute.xlu0 %582
        %586 = vset.pattern.permute.xlu0 0
        %587 = vperm.xlu0 %586, %v513
        %v588 = vpop.permute.xlu0 %587
        %591 = vset.pattern.permute.xlu0 0
        %592 = vperm.xlu0 %591, %v514
        %v593 = vpop.permute.xlu0 %592
        %596 = vset.pattern.permute.xlu0 0
        %597 = vperm.xlu0 %596, %v515
        %v598 = vpop.permute.xlu0 %597
        %601 = vset.pattern.permute.xlu0 0
        %602 = vperm.xlu0 %601, %v516
        %v603 = vpop.permute.xlu0 %602
        %606 = vset.pattern.permute.xlu0 0
        %607 = vperm.xlu0 %606, %v517
        %v608 = vpop.permute.xlu0 %607
        %611 = vset.pattern.permute.xlu0 0
        %612 = vperm.xlu0 %611, %v518
        %v613 = vpop.permute.xlu0 %612
        %616 = vset.pattern.permute.xlu0 0
        %617 = vperm.xlu0 %616, %v519
        %v618 = vpop.permute.xlu0 %617
        %621 = vset.pattern.permute.xlu0 0
        %622 = vperm.xlu0 %621, %v520
        %v623 = vpop.permute.xlu0 %622
        %626 = vset.pattern.permute.xlu0 0
        %627 = vperm.xlu0 %626, %v521
        %v628 = vpop.permute.xlu0 %627
        %631 = vset.pattern.permute.xlu0 0
        %632 = vperm.xlu0 %631, %v522
        %v633 = vpop.permute.xlu0 %632
        %636 = vset.pattern.permute.xlu0 0
        %637 = vperm.xlu0 %636, %v523
        %v638 = vpop.permute.xlu0 %637
        %641 = vset.pattern.permute.xlu0 0
        %642 = vperm.xlu0 %641, %v524
        %v643 = vpop.permute.xlu0 %642
        %646 = vset.pattern.permute.xlu0 0
        %647 = vperm.xlu0 %646, %v525
        %v648 = vpop.permute.xlu0 %647
        %651 = vset.pattern.permute.xlu0 0
        %652 = vperm.xlu0 %651, %v526
        %v653 = vpop.permute.xlu0 %652
        %656 = vset.pattern.permute.xlu0 0
        %657 = vperm.xlu0 %656, %v527
        %v658 = vpop.permute.xlu0 %657
        %661 = vset.pattern.permute.xlu0 0
        %662 = vperm.xlu0 %661, %v528
        %v663 = vpop.permute.xlu0 %662
        %666 = vset.pattern.permute.xlu0 0
        %667 = vperm.xlu0 %666, %v529
        %v668 = vpop.permute.xlu0 %667
        %671 = vset.pattern.permute.xlu0 0
        %672 = vperm.xlu0 %671, %v530
        %v673 = vpop.permute.xlu0 %672
        %676 = vset.pattern.permute.xlu0 0
        %677 = vperm.xlu0 %676, %v531
        %v678 = vpop.permute.xlu0 %677
        %681 = vset.pattern.permute.xlu0 0
        %682 = vperm.xlu0 %681, %v532
        %v683 = vpop.permute.xlu0 %682
        %686 = vset.pattern.permute.xlu0 0
        %687 = vperm.xlu0 %686, %v533
        %v688 = vpop.permute.xlu0 %687
        %691 = vset.pattern.permute.xlu0 0
        %692 = vperm.xlu0 %691, %v534
        %v693 = vpop.permute.xlu0 %692
        %695 = vmatprep.subr.mxu0 0.0
        %696 = vmatpush1.msra.mxu0 %v486
        %697 = vmatprep.subr.mxu0 0.0
        %698 = vmatpush1.msra.mxu0 %v485
        %699 = vmatprep.subr.mxu0 0.0
        %700 = vmatpush1.msra.mxu0 %v484
        %701 = vmatprep.subr.mxu0 0.0
        %702 = vmatpush1.msra.mxu0 %v483
        %703 = vmatprep.subr.mxu0 0.0
        %704 = vmatpush1.msra.mxu0 %v482
        %705 = vmatprep.subr.mxu0 0.0
        %706 = vmatpush1.msra.mxu0 %v481
        %707 = vmatprep.subr.mxu0 0.0
        %708 = vmatpush1.msra.mxu0 %v480
        %709 = vmatprep.subr.mxu0 0.0
        %710 = vmatpush1.msra.mxu0 %v479
        %711 = vmatprep.subr.mxu0 0.0
        %712 = vmatpush1.msra.mxu0 %v478
        %713 = vmatprep.subr.mxu0 0.0
        %714 = vmatpush1.msra.mxu0 %v477
        %715 = vmatprep.subr.mxu0 0.0
        %716 = vmatpush1.msra.mxu0 %v476
        %717 = vmatprep.subr.mxu0 0.0
        %718 = vmatpush1.msra.mxu0 %v475
        %719 = vmatprep.subr.mxu0 0.0
        %720 = vmatpush1.msra.mxu0 %v474
        %721 = vmatprep.subr.mxu0 0.0
        %722 = vmatpush1.msra.mxu0 %v473
        %723 = vmatprep.subr.mxu0 0.0
        %724 = vmatpush1.msra.mxu0 %v472
        %725 = vmatprep.subr.mxu0 0.0
        %726 = vmatpush1.msra.mxu0 %v471
        %727 = vmatprep.subr.mxu0 0.0
        %728 = vmatpush2.msra.mxu0 %v502
        %729 = vmatprep.subr.mxu0 0.0
        %730 = vmatpush2.msra.mxu0 %v501
        %731 = vmatprep.subr.mxu0 0.0
        %732 = vmatpush2.msra.mxu0 %v500
        %733 = vmatprep.subr.mxu0 0.0
        %734 = vmatpush2.msra.mxu0 %v499
        %735 = vmatprep.subr.mxu0 0.0
        %736 = vmatpush2.msra.mxu0 %v498
        %737 = vmatprep.subr.mxu0 0.0
        %738 = vmatpush2.msra.mxu0 %v497
        %739 = vmatprep.subr.mxu0 0.0
        %740 = vmatpush2.msra.mxu0 %v496
        %741 = vmatprep.subr.mxu0 0.0
        %742 = vmatpush2.msra.mxu0 %v495
        %743 = vmatprep.subr.mxu0 0.0
        %744 = vmatpush2.msra.mxu0 %v494
        %745 = vmatprep.subr.mxu0 0.0
        %746 = vmatpush2.msra.mxu0 %v493
        %747 = vmatprep.subr.mxu0 0.0
        %748 = vmatpush2.msra.mxu0 %v492
        %749 = vmatprep.subr.mxu0 0.0
        %750 = vmatpush2.msra.mxu0 %v491
        %751 = vmatprep.subr.mxu0 0.0
        %752 = vmatpush2.msra.mxu0 %v490
        %753 = vmatprep.subr.mxu0 0.0
        %754 = vmatpush2.msra.mxu0 %v489
        %755 = vmatprep.subr.mxu0 0.0
        %756 = vmatpush2.msra.mxu0 %v488
        %757 = vmatprep.subr.mxu0 0.0
        %758 = vmatpush2.msra.mxu0 %v487
        %759 = vmatprep.mubr.f32.mxu0 %v408
        %760 = vmatmul.mubr.f32.gmra.mxu0 %v407
        %v761 = vpop.f32.mrf.mxu0
        %v762 = vadd.f32 %v538, %v761
        %v763 = vpop.f32.mrf.mxu0
        %764 = vmatprep.mubr.f32.mxu0 %v410
        %765 = vmatmul.mubr.f32.gmra.mxu0 %v409
        %v766 = vpop.f32.mrf.mxu0
        %v767 = vadd.f32 %v543, %v766
        %v768 = vpop.f32.mrf.mxu0
        %769 = vmatprep.mubr.f32.mxu0 %v412
        %770 = vmatmul.mubr.f32.gmra.mxu0 %v411
        %v771 = vpop.f32.mrf.mxu0
        %v772 = vadd.f32 %v548, %v771
        %v773 = vpop.f32.mrf.mxu0
        %774 = vmatprep.mubr.f32.mxu0 %v414
        %775 = vmatmul.mubr.f32.gmra.mxu0 %v413
        %v776 = vpop.f32.mrf.mxu0
        %v777 = vadd.f32 %v553, %v776
        %v778 = vpop.f32.mrf.mxu0
        %779 = vmatprep.mubr.f32.mxu0 %v416
        %780 = vmatmul.mubr.f32.gmra.mxu0 %v415
        %v781 = vpop.f32.mrf.mxu0
        %v782 = vadd.f32 %v558, %v781
        %v783 = vpop.f32.mrf.mxu0
        %784 = vmatprep.mubr.f32.mxu0 %v418
        %785 = vmatmul.mubr.f32.gmra.mxu0 %v417
        %v786 = vpop.f32.mrf.mxu0
        %v787 = vadd.f32 %v563, %v786
        %v788 = vpop.f32.mrf.mxu0
        %789 = vmatprep.mubr.f32.mxu0 %v420
        %790 = vmatmul.mubr.f32.gmra.mxu0 %v419
        %v791 = vpop.f32.mrf.mxu0
        %v792 = vadd.f32 %v568, %v791
        %v793 = vpop.f32.mrf.mxu0
        %794 = vmatprep.mubr.f32.mxu0 %v422
        %795 = vmatmul.mubr.f32.gmra.mxu0 %v421
        %v796 = vpop.f32.mrf.mxu0
        %v797 = vadd.f32 %v573, %v796
        %v798 = vpop.f32.mrf.mxu0
        %799 = vmatprep.mubr.f32.mxu0 %v424
        %800 = vmatmul.mubr.f32.gmra.mxu0 %v423
        %v801 = vpop.f32.mrf.mxu0
        %v802 = vadd.f32 %v578, %v801
        %v803 = vpop.f32.mrf.mxu0
        %804 = vmatprep.mubr.f32.mxu0 %v426
        %805 = vmatmul.mubr.f32.gmra.mxu0 %v425
        %v806 = vpop.f32.mrf.mxu0
        %v807 = vadd.f32 %v583, %v806
        %v808 = vpop.f32.mrf.mxu0
        %809 = vmatprep.mubr.f32.mxu0 %v428
        %810 = vmatmul.mubr.f32.gmra.mxu0 %v427
        %v811 = vpop.f32.mrf.mxu0
        %v812 = vadd.f32 %v588, %v811
        %v813 = vpop.f32.mrf.mxu0
        %814 = vmatprep.mubr.f32.mxu0 %v430
        %815 = vmatmul.mubr.f32.gmra.mxu0 %v429
        %v816 = vpop.f32.mrf.mxu0
        %v817 = vadd.f32 %v593, %v816
        %v818 = vpop.f32.mrf.mxu0
        %819 = vmatprep.mubr.f32.mxu0 %v432
        %820 = vmatmul.mubr.f32.gmra.mxu0 %v431
        %v821 = vpop.f32.mrf.mxu0
        %v822 = vadd.f32 %v598, %v821
        %v823 = vpop.f32.mrf.mxu0
        %824 = vmatprep.mubr.f32.mxu0 %v434
        %825 = vmatmul.mubr.f32.gmra.mxu0 %v433
        %v826 = vpop.f32.mrf.mxu0
        %v827 = vadd.f32 %v603, %v826
        %v828 = vpop.f32.mrf.mxu0
        %829 = vmatprep.mubr.f32.mxu0 %v436
        %830 = vmatmul.mubr.f32.gmra.mxu0 %v435
        %v831 = vpop.f32.mrf.mxu0
        %v832 = vadd.f32 %v608, %v831
        %v833 = vpop.f32.mrf.mxu0
        %834 = vmatprep.mubr.f32.mxu0 %v438
        %835 = vmatmul.mubr.f32.gmra.mxu0 %v437
        %v836 = vpop.f32.mrf.mxu0
        %v837 = vadd.f32 %v613, %v836
        %v838 = vpop.f32.mrf.mxu0
        %839 = vmatprep.mubr.f32.mxu0 %v440
        %840 = vmatmul.mubr.f32.gmra.mxu0 %v439
        %v841 = vpop.f32.mrf.mxu0
        %v842 = vadd.f32 %v618, %v841
        %v843 = vpop.f32.mrf.mxu0
        %844 = vmatprep.mubr.f32.mxu0 %v442
        %845 = vmatmul.mubr.f32.gmra.mxu0 %v441
        %v846 = vpop.f32.mrf.mxu0
        %v847 = vadd.f32 %v623, %v846
        %v848 = vpop.f32.mrf.mxu0
        %849 = vmatprep.mubr.f32.mxu0 %v444
        %850 = vmatmul.mubr.f32.gmra.mxu0 %v443
        %v851 = vpop.f32.mrf.mxu0
        %v852 = vadd.f32 %v628, %v851
        %v853 = vpop.f32.mrf.mxu0
        %854 = vmatprep.mubr.f32.mxu0 %v446
        %855 = vmatmul.mubr.f32.gmra.mxu0 %v445
        %v856 = vpop.f32.mrf.mxu0
        %v857 = vadd.f32 %v633, %v856
        %v858 = vpop.f32.mrf.mxu0
        %859 = vmatprep.mubr.f32.mxu0 %v448
        %860 = vmatmul.mubr.f32.gmra.mxu0 %v447
        %v861 = vpop.f32.mrf.mxu0
        %v862 = vadd.f32 %v638, %v861
        %v863 = vpop.f32.mrf.mxu0
        %864 = vmatprep.mubr.f32.mxu0 %v450
        %865 = vmatmul.mubr.f32.gmra.mxu0 %v449
        %v866 = vpop.f32.mrf.mxu0
        %v867 = vadd.f32 %v643, %v866
        %v868 = vpop.f32.mrf.mxu0
        %869 = vmatprep.mubr.f32.mxu0 %v452
        %870 = vmatmul.mubr.f32.gmra.mxu0 %v451
        %v871 = vpop.f32.mrf.mxu0
        %v872 = vadd.f32 %v648, %v871
        %v873 = vpop.f32.mrf.mxu0
        %874 = vmatprep.mubr.f32.mxu0 %v454
        %875 = vmatmul.mubr.f32.gmra.mxu0 %v453
        %v876 = vpop.f32.mrf.mxu0
        %v877 = vadd.f32 %v653, %v876
        %v878 = vpop.f32.mrf.mxu0
        %879 = vmatprep.mubr.f32.mxu0 %v456
        %880 = vmatmul.mubr.f32.gmra.mxu0 %v455
        %v881 = vpop.f32.mrf.mxu0
        %v882 = vadd.f32 %v658, %v881
        %v883 = vpop.f32.mrf.mxu0
        %884 = vmatprep.mubr.f32.mxu0 %v458
        %885 = vmatmul.mubr.f32.gmra.mxu0 %v457
        %v886 = vpop.f32.mrf.mxu0
        %v887 = vadd.f32 %v663, %v886
        %v888 = vpop.f32.mrf.mxu0
        %889 = vmatprep.mubr.f32.mxu0 %v460
        %890 = vmatmul.mubr.f32.gmra.mxu0 %v459
        %v891 = vpop.f32.mrf.mxu0
        %v892 = vadd.f32 %v668, %v891
        %v893 = vpop.f32.mrf.mxu0
        %894 = vmatprep.mubr.f32.mxu0 %v462
        %895 = vmatmul.mubr.f32.gmra.mxu0 %v461
        %v896 = vpop.f32.mrf.mxu0
        %v897 = vadd.f32 %v673, %v896
        %v898 = vpop.f32.mrf.mxu0
        %899 = vmatprep.mubr.f32.mxu0 %v464
        %900 = vmatmul.mubr.f32.gmra.mxu0 %v463
        %v901 = vpop.f32.mrf.mxu0
        %v902 = vadd.f32 %v678, %v901
        %v903 = vpop.f32.mrf.mxu0
        %904 = vmatprep.mubr.f32.mxu0 %v466
        %905 = vmatmul.mubr.f32.gmra.mxu0 %v465
        %v906 = vpop.f32.mrf.mxu0
        %v907 = vadd.f32 %v683, %v906
        %v908 = vpop.f32.mrf.mxu0
        %909 = vmatprep.mubr.f32.mxu0 %v468
        %910 = vmatmul.mubr.f32.gmra.mxu0 %v467
        %v911 = vpop.f32.mrf.mxu0
        %v912 = vadd.f32 %v688, %v911
        %v913 = vpop.f32.mrf.mxu0
        %914 = vmatprep.mubr.f32.mxu0 %v470
        %915 = vmatmul.mubr.f32.gmra.mxu0 %v469
        %v916 = vpop.f32.mrf.mxu0
        %v917 = vadd.f32 %v693, %v916
        %v918 = vpop.f32.mrf.mxu0
        %919 = vdwg.mxu0
        %v920 = vmax.f32 %v762, 0.0
        %v921 = vmax.f32 %v767, 0.0
        %v922 = vmax.f32 %v772, 0.0
        %v923 = vmax.f32 %v777, 0.0
        %v924 = vmax.f32 %v782, 0.0
        %v925 = vmax.f32 %v787, 0.0
        %v926 = vmax.f32 %v792, 0.0
        %v927 = vmax.f32 %v797, 0.0
        %v928 = vmax.f32 %v802, 0.0
        %v929 = vmax.f32 %v807, 0.0
        %v930 = vmax.f32 %v812, 0.0
        %v931 = vmax.f32 %v817, 0.0
        %v932 = vmax.f32 %v822, 0.0
        %v933 = vmax.f32 %v827, 0.0
        %v934 = vmax.f32 %v832, 0.0
        %v935 = vmax.f32 %v837, 0.0
        %v936 = vmax.f32 %v842, 0.0
        %v937 = vmax.f32 %v847, 0.0
        %v938 = vmax.f32 %v852, 0.0
        %v939 = vmax.f32 %v857, 0.0
        %v940 = vmax.f32 %v862, 0.0
        %v941 = vmax.f32 %v867, 0.0
        %v942 = vmax.f32 %v872, 0.0
        %v943 = vmax.f32 %v877, 0.0
        %v944 = vmax.f32 %v882, 0.0
        %v945 = vmax.f32 %v887, 0.0
        %v946 = vmax.f32 %v892, 0.0
        %v947 = vmax.f32 %v897, 0.0
        %v948 = vmax.f32 %v902, 0.0
        %v949 = vmax.f32 %v907, 0.0
        %v950 = vmax.f32 %v912, 0.0
        %v951 = vmax.f32 %v917, 0.0
        %v952 = vld [vmem:[#allocation7] sm:$0xff]
        %v953 = vld [vmem:[#allocation7 + $0x8] sm:$0xff]
        %v954 = vld [vmem:[#allocation7 + $0x10] sm:$0xff]
        %v955 = vld [vmem:[#allocation7 + $0x18] sm:$0xff]
        %v956 = vld [vmem:[#allocation7 + $0x20] sm:$0xff]
        %v957 = vld [vmem:[#allocation7 + $0x28] sm:$0xff]
        %v958 = vld [vmem:[#allocation7 + $0x30] sm:$0xff]
        %v959 = vld [vmem:[#allocation7 + $0x38] sm:$0xff]
        %v960 = vld [vmem:[#allocation7 + $0x40] sm:$0xff]
        %v961 = vld [vmem:[#allocation7 + $0x48] sm:$0xff]
        %v962 = vld [vmem:[#allocation7 + $0x50] sm:$0xff]
        %v963 = vld [vmem:[#allocation7 + $0x58] sm:$0xff]
        %v964 = vld [vmem:[#allocation7 + $0x60] sm:$0xff]
        %v965 = vld [vmem:[#allocation7 + $0x68] sm:$0xff]
        %v966 = vld [vmem:[#allocation7 + $0x70] sm:$0xff]
        %v967 = vld [vmem:[#allocation7 + $0x78] sm:$0xff]
        %v968 = vld [vmem:[#allocation7 + $0x80] sm:$0xff]
        %v969 = vld [vmem:[#allocation7 + $0x88] sm:$0xff]
        %v970 = vld [vmem:[#allocation7 + $0x90] sm:$0xff]
        %v971 = vld [vmem:[#allocation7 + $0x98] sm:$0xff]
        %v972 = vld [vmem:[#allocation7 + $0xa0] sm:$0xff]
        %v973 = vld [vmem:[#allocation7 + $0xa8] sm:$0xff]
        %v974 = vld [vmem:[#allocation7 + $0xb0] sm:$0xff]
        %v975 = vld [vmem:[#allocation7 + $0xb8] sm:$0xff]
        %v976 = vld [vmem:[#allocation7 + $0xc0] sm:$0xff]
        %v977 = vld [vmem:[#allocation7 + $0xc8] sm:$0xff]
        %v978 = vld [vmem:[#allocation7 + $0xd0] sm:$0xff]
        %v979 = vld [vmem:[#allocation7 + $0xd8] sm:$0xff]
        %v980 = vld [vmem:[#allocation7 + $0xe0] sm:$0xff]
        %v981 = vld [vmem:[#allocation7 + $0xe8] sm:$0xff]
        %v982 = vld [vmem:[#allocation7 + $0xf0] sm:$0xff]
        %v983 = vld [vmem:[#allocation7 + $0xf8] sm:$0xff]
        %v984 = vld [vmem:[#allocation7 + $0x100] sm:$0xff]
        %v985 = vld [vmem:[#allocation7 + $0x108] sm:$0xff]
        %v986 = vld [vmem:[#allocation7 + $0x110] sm:$0xff]
        %v987 = vld [vmem:[#allocation7 + $0x118] sm:$0xff]
        %v988 = vld [vmem:[#allocation7 + $0x120] sm:$0xff]
        %v989 = vld [vmem:[#allocation7 + $0x128] sm:$0xff]
        %v990 = vld [vmem:[#allocation7 + $0x130] sm:$0xff]
        %v991 = vld [vmem:[#allocation7 + $0x138] sm:$0xff]
        %v992 = vld [vmem:[#allocation7 + $0x140] sm:$0xff]
        %v993 = vld [vmem:[#allocation7 + $0x148] sm:$0xff]
        %v994 = vld [vmem:[#allocation7 + $0x150] sm:$0xff]
        %v995 = vld [vmem:[#allocation7 + $0x158] sm:$0xff]
        %v996 = vld [vmem:[#allocation7 + $0x160] sm:$0xff]
        %v997 = vld [vmem:[#allocation7 + $0x168] sm:$0xff]
        %v998 = vld [vmem:[#allocation7 + $0x170] sm:$0xff]
        %v999 = vld [vmem:[#allocation7 + $0x178] sm:$0xff]
        %v1000 = vld [vmem:[#allocation7 + $0x180] sm:$0xff]
        %v1001 = vld [vmem:[#allocation7 + $0x188] sm:$0xff]
        %v1002 = vld [vmem:[#allocation7 + $0x190] sm:$0xff]
        %v1003 = vld [vmem:[#allocation7 + $0x198] sm:$0xff]
        %v1004 = vld [vmem:[#allocation7 + $0x1a0] sm:$0xff]
        %v1005 = vld [vmem:[#allocation7 + $0x1a8] sm:$0xff]
        %v1006 = vld [vmem:[#allocation7 + $0x1b0] sm:$0xff]
        %v1007 = vld [vmem:[#allocation7 + $0x1b8] sm:$0xff]
        %v1008 = vld [vmem:[#allocation7 + $0x1c0] sm:$0xff]
        %v1009 = vld [vmem:[#allocation7 + $0x1c8] sm:$0xff]
        %v1010 = vld [vmem:[#allocation7 + $0x1d0] sm:$0xff]
        %v1011 = vld [vmem:[#allocation7 + $0x1d8] sm:$0xff]
        %v1012 = vld [vmem:[#allocation7 + $0x1e0] sm:$0xff]
        %v1013 = vld [vmem:[#allocation7 + $0x1e8] sm:$0xff]
        %v1014 = vld [vmem:[#allocation7 + $0x1f0] sm:$0xff]
        %v1015 = vld [vmem:[#allocation7 + $0x1f8] sm:$0xff]
        %v1016 = vld [vmem:[%s5] sm:$0xff]
        %v1017 = vld [vmem:[%s5 + $0x8] sm:$0xff]
        %v1018 = vld [vmem:[%s5 + $0x10] sm:$0xff]
        %v1019 = vld [vmem:[%s5 + $0x18] sm:$0xff]
        %v1020 = vld [vmem:[%s5 + $0x20] sm:$0xff]
        %v1021 = vld [vmem:[%s5 + $0x28] sm:$0xff]
        %v1022 = vld [vmem:[%s5 + $0x30] sm:$0xff]
        %v1023 = vld [vmem:[%s5 + $0x38] sm:$0xff]
        %v1024 = vld [vmem:[%s5 + $0x40] sm:$0xff]
        %v1025 = vld [vmem:[%s5 + $0x48] sm:$0xff]
        %v1026 = vld [vmem:[%s5 + $0x50] sm:$0xff]
        %v1027 = vld [vmem:[%s5 + $0x58] sm:$0xff]
        %v1028 = vld [vmem:[%s5 + $0x60] sm:$0xff]
        %v1029 = vld [vmem:[%s5 + $0x68] sm:$0xff]
        %v1030 = vld [vmem:[%s5 + $0x70] sm:$0xff]
        %v1031 = vld [vmem:[%s5 + $0x78] sm:$0xff]
        %v1032 = vld [vmem:[%s5 + $0x80] sm:$0xff]
        %v1033 = vld [vmem:[%s5 + $0x88] sm:$0xff]
        %v1034 = vld [vmem:[%s5 + $0x90] sm:$0xff]
        %v1035 = vld [vmem:[%s5 + $0x98] sm:$0xff]
        %v1036 = vld [vmem:[%s5 + $0xa0] sm:$0xff]
        %v1037 = vld [vmem:[%s5 + $0xa8] sm:$0xff]
        %v1038 = vld [vmem:[%s5 + $0xb0] sm:$0xff]
        %v1039 = vld [vmem:[%s5 + $0xb8] sm:$0xff]
        %v1040 = vld [vmem:[%s5 + $0xc0] sm:$0xff]
        %v1041 = vld [vmem:[%s5 + $0xc8] sm:$0xff]
        %v1042 = vld [vmem:[%s5 + $0xd0] sm:$0xff]
        %v1043 = vld [vmem:[%s5 + $0xd8] sm:$0xff]
        %v1044 = vld [vmem:[%s5 + $0xe0] sm:$0xff]
        %v1045 = vld [vmem:[%s5 + $0xe8] sm:$0xff]
        %v1046 = vld [vmem:[%s5 + $0xf0] sm:$0xff]
        %v1047 = vld [vmem:[%s5 + $0xf8] sm:$0xff]
        %1049 = vset.pattern.permute.xlu0 0
        %1050 = vperm.xlu0 %1049, %v1016
        %v1051 = vpop.permute.xlu0 %1050
        %1054 = vset.pattern.permute.xlu0 0
        %1055 = vperm.xlu0 %1054, %v1017
        %v1056 = vpop.permute.xlu0 %1055
        %1059 = vset.pattern.permute.xlu0 0
        %1060 = vperm.xlu0 %1059, %v1018
        %v1061 = vpop.permute.xlu0 %1060
        %1064 = vset.pattern.permute.xlu0 0
        %1065 = vperm.xlu0 %1064, %v1019
        %v1066 = vpop.permute.xlu0 %1065
        %1069 = vset.pattern.permute.xlu0 0
        %1070 = vperm.xlu0 %1069, %v1020
        %v1071 = vpop.permute.xlu0 %1070
        %1074 = vset.pattern.permute.xlu0 0
        %1075 = vperm.xlu0 %1074, %v1021
        %v1076 = vpop.permute.xlu0 %1075
        %1079 = vset.pattern.permute.xlu0 0
        %1080 = vperm.xlu0 %1079, %v1022
        %v1081 = vpop.permute.xlu0 %1080
        %1084 = vset.pattern.permute.xlu0 0
        %1085 = vperm.xlu0 %1084, %v1023
        %v1086 = vpop.permute.xlu0 %1085
        %1089 = vset.pattern.permute.xlu0 0
        %1090 = vperm.xlu0 %1089, %v1024
        %v1091 = vpop.permute.xlu0 %1090
        %1094 = vset.pattern.permute.xlu0 0
        %1095 = vperm.xlu0 %1094, %v1025
        %v1096 = vpop.permute.xlu0 %1095
        %1099 = vset.pattern.permute.xlu0 0
        %1100 = vperm.xlu0 %1099, %v1026
        %v1101 = vpop.permute.xlu0 %1100
        %1104 = vset.pattern.permute.xlu0 0
        %1105 = vperm.xlu0 %1104, %v1027
        %v1106 = vpop.permute.xlu0 %1105
        %1109 = vset.pattern.permute.xlu0 0
        %1110 = vperm.xlu0 %1109, %v1028
        %v1111 = vpop.permute.xlu0 %1110
        %1114 = vset.pattern.permute.xlu0 0
        %1115 = vperm.xlu0 %1114, %v1029
        %v1116 = vpop.permute.xlu0 %1115
        %1119 = vset.pattern.permute.xlu0 0
        %1120 = vperm.xlu0 %1119, %v1030
        %v1121 = vpop.permute.xlu0 %1120
        %1124 = vset.pattern.permute.xlu0 0
        %1125 = vperm.xlu0 %1124, %v1031
        %v1126 = vpop.permute.xlu0 %1125
        %1129 = vset.pattern.permute.xlu0 0
        %1130 = vperm.xlu0 %1129, %v1032
        %v1131 = vpop.permute.xlu0 %1130
        %1134 = vset.pattern.permute.xlu0 0
        %1135 = vperm.xlu0 %1134, %v1033
        %v1136 = vpop.permute.xlu0 %1135
        %1139 = vset.pattern.permute.xlu0 0
        %1140 = vperm.xlu0 %1139, %v1034
        %v1141 = vpop.permute.xlu0 %1140
        %1144 = vset.pattern.permute.xlu0 0
        %1145 = vperm.xlu0 %1144, %v1035
        %v1146 = vpop.permute.xlu0 %1145
        %1149 = vset.pattern.permute.xlu0 0
        %1150 = vperm.xlu0 %1149, %v1036
        %v1151 = vpop.permute.xlu0 %1150
        %1154 = vset.pattern.permute.xlu0 0
        %1155 = vperm.xlu0 %1154, %v1037
        %v1156 = vpop.permute.xlu0 %1155
        %1159 = vset.pattern.permute.xlu0 0
        %1160 = vperm.xlu0 %1159, %v1038
        %v1161 = vpop.permute.xlu0 %1160
        %1164 = vset.pattern.permute.xlu0 0
        %1165 = vperm.xlu0 %1164, %v1039
        %v1166 = vpop.permute.xlu0 %1165
        %1169 = vset.pattern.permute.xlu0 0
        %1170 = vperm.xlu0 %1169, %v1040
        %v1171 = vpop.permute.xlu0 %1170
        %1174 = vset.pattern.permute.xlu0 0
        %1175 = vperm.xlu0 %1174, %v1041
        %v1176 = vpop.permute.xlu0 %1175
        %1179 = vset.pattern.permute.xlu0 0
        %1180 = vperm.xlu0 %1179, %v1042
        %v1181 = vpop.permute.xlu0 %1180
        %1184 = vset.pattern.permute.xlu0 0
        %1185 = vperm.xlu0 %1184, %v1043
        %v1186 = vpop.permute.xlu0 %1185
        %1189 = vset.pattern.permute.xlu0 0
        %1190 = vperm.xlu0 %1189, %v1044
        %v1191 = vpop.permute.xlu0 %1190
        %1194 = vset.pattern.permute.xlu0 0
        %1195 = vperm.xlu0 %1194, %v1045
        %v1196 = vpop.permute.xlu0 %1195
        %1199 = vset.pattern.permute.xlu0 0
        %1200 = vperm.xlu0 %1199, %v1046
        %v1201 = vpop.permute.xlu0 %1200
        %1204 = vset.pattern.permute.xlu0 0
        %1205 = vperm.xlu0 %1204, %v1047
        %v1206 = vpop.permute.xlu0 %1205
        %1208 = vmatprep.subr.mxu0 0.0
        %1209 = vmatpush1.msra.mxu0 %v935
        %1210 = vmatprep.subr.mxu0 0.0
        %1211 = vmatpush1.msra.mxu0 %v934
        %1212 = vmatprep.subr.mxu0 0.0
        %1213 = vmatpush1.msra.mxu0 %v933
        %1214 = vmatprep.subr.mxu0 0.0
        %1215 = vmatpush1.msra.mxu0 %v932
        %1216 = vmatprep.subr.mxu0 0.0
        %1217 = vmatpush1.msra.mxu0 %v931
        %1218 = vmatprep.subr.mxu0 0.0
        %1219 = vmatpush1.msra.mxu0 %v930
        %1220 = vmatprep.subr.mxu0 0.0
        %1221 = vmatpush1.msra.mxu0 %v929
        %1222 = vmatprep.subr.mxu0 0.0
        %1223 = vmatpush1.msra.mxu0 %v928
        %1224 = vmatprep.subr.mxu0 0.0
        %1225 = vmatpush1.msra.mxu0 %v927
        %1226 = vmatprep.subr.mxu0 0.0
        %1227 = vmatpush1.msra.mxu0 %v926
        %1228 = vmatprep.subr.mxu0 0.0
        %1229 = vmatpush1.msra.mxu0 %v925
        %1230 = vmatprep.subr.mxu0 0.0
        %1231 = vmatpush1.msra.mxu0 %v924
        %1232 = vmatprep.subr.mxu0 0.0
        %1233 = vmatpush1.msra.mxu0 %v923
        %1234 = vmatprep.subr.mxu0 0.0
        %1235 = vmatpush1.msra.mxu0 %v922
        %1236 = vmatprep.subr.mxu0 0.0
        %1237 = vmatpush1.msra.mxu0 %v921
        %1238 = vmatprep.subr.mxu0 0.0
        %1239 = vmatpush1.msra.mxu0 %v920
        %1240 = vmatprep.subr.mxu0 0.0
        %1241 = vmatpush2.msra.mxu0 %v951
        %1242 = vmatprep.subr.mxu0 0.0
        %1243 = vmatpush2.msra.mxu0 %v950
        %1244 = vmatprep.subr.mxu0 0.0
        %1245 = vmatpush2.msra.mxu0 %v949
        %1246 = vmatprep.subr.mxu0 0.0
        %1247 = vmatpush2.msra.mxu0 %v948
        %1248 = vmatprep.subr.mxu0 0.0
        %1249 = vmatpush2.msra.mxu0 %v947
        %1250 = vmatprep.subr.mxu0 0.0
        %1251 = vmatpush2.msra.mxu0 %v946
        %1252 = vmatprep.subr.mxu0 0.0
        %1253 = vmatpush2.msra.mxu0 %v945
        %1254 = vmatprep.subr.mxu0 0.0
        %1255 = vmatpush2.msra.mxu0 %v944
        %1256 = vmatprep.subr.mxu0 0.0
        %1257 = vmatpush2.msra.mxu0 %v943
        %1258 = vmatprep.subr.mxu0 0.0
        %1259 = vmatpush2.msra.mxu0 %v942
        %1260 = vmatprep.subr.mxu0 0.0
        %1261 = vmatpush2.msra.mxu0 %v941
        %1262 = vmatprep.subr.mxu0 0.0
        %1263 = vmatpush2.msra.mxu0 %v940
        %1264 = vmatprep.subr.mxu0 0.0
        %1265 = vmatpush2.msra.mxu0 %v939
        %1266 = vmatprep.subr.mxu0 0.0
        %1267 = vmatpush2.msra.mxu0 %v938
        %1268 = vmatprep.subr.mxu0 0.0
        %1269 = vmatpush2.msra.mxu0 %v937
        %1270 = vmatprep.subr.mxu0 0.0
        %1271 = vmatpush2.msra.mxu0 %v936
        %1272 = vmatprep.mubr.f32.mxu0 %v953
        %1273 = vmatmul.mubr.f32.gmra.mxu0 %v952
        %v1274 = vpop.f32.mrf.mxu0
        %v1275 = vadd.f32 %v1051, %v1274
        %v1276 = vpop.f32.mrf.mxu0
        %1277 = vmatprep.mubr.f32.mxu0 %v955
        %1278 = vmatmul.mubr.f32.gmra.mxu0 %v954
        %v1279 = vpop.f32.mrf.mxu0
        %v1280 = vadd.f32 %v1056, %v1279
        %v1281 = vpop.f32.mrf.mxu0
        %1282 = vmatprep.mubr.f32.mxu0 %v957
        %1283 = vmatmul.mubr.f32.gmra.mxu0 %v956
        %v1284 = vpop.f32.mrf.mxu0
        %v1285 = vadd.f32 %v1061, %v1284
        %v1286 = vpop.f32.mrf.mxu0
        %1287 = vmatprep.mubr.f32.mxu0 %v959
        %1288 = vmatmul.mubr.f32.gmra.mxu0 %v958
        %v1289 = vpop.f32.mrf.mxu0
        %v1290 = vadd.f32 %v1066, %v1289
        %v1291 = vpop.f32.mrf.mxu0
        %1292 = vmatprep.mubr.f32.mxu0 %v961
        %1293 = vmatmul.mubr.f32.gmra.mxu0 %v960
        %v1294 = vpop.f32.mrf.mxu0
        %v1295 = vadd.f32 %v1071, %v1294
        %v1296 = vpop.f32.mrf.mxu0
        %1297 = vmatprep.mubr.f32.mxu0 %v963
        %1298 = vmatmul.mubr.f32.gmra.mxu0 %v962
        %v1299 = vpop.f32.mrf.mxu0
        %v1300 = vadd.f32 %v1076, %v1299
        %v1301 = vpop.f32.mrf.mxu0
        %1302 = vmatprep.mubr.f32.mxu0 %v965
        %1303 = vmatmul.mubr.f32.gmra.mxu0 %v964
        %v1304 = vpop.f32.mrf.mxu0
        %v1305 = vadd.f32 %v1081, %v1304
        %v1306 = vpop.f32.mrf.mxu0
        %1307 = vmatprep.mubr.f32.mxu0 %v967
        %1308 = vmatmul.mubr.f32.gmra.mxu0 %v966
        %v1309 = vpop.f32.mrf.mxu0
        %v1310 = vadd.f32 %v1086, %v1309
        %v1311 = vpop.f32.mrf.mxu0
        %1312 = vmatprep.mubr.f32.mxu0 %v969
        %1313 = vmatmul.mubr.f32.gmra.mxu0 %v968
        %v1314 = vpop.f32.mrf.mxu0
        %v1315 = vadd.f32 %v1091, %v1314
        %v1316 = vpop.f32.mrf.mxu0
        %1317 = vmatprep.mubr.f32.mxu0 %v971
        %1318 = vmatmul.mubr.f32.gmra.mxu0 %v970
        %v1319 = vpop.f32.mrf.mxu0
        %v1320 = vadd.f32 %v1096, %v1319
        %v1321 = vpop.f32.mrf.mxu0
        %1322 = vmatprep.mubr.f32.mxu0 %v973
        %1323 = vmatmul.mubr.f32.gmra.mxu0 %v972
        %v1324 = vpop.f32.mrf.mxu0
        %v1325 = vadd.f32 %v1101, %v1324
        %v1326 = vpop.f32.mrf.mxu0
        %1327 = vmatprep.mubr.f32.mxu0 %v975
        %1328 = vmatmul.mubr.f32.gmra.mxu0 %v974
        %v1329 = vpop.f32.mrf.mxu0
        %v1330 = vadd.f32 %v1106, %v1329
        %v1331 = vpop.f32.mrf.mxu0
        %1332 = vmatprep.mubr.f32.mxu0 %v977
        %1333 = vmatmul.mubr.f32.gmra.mxu0 %v976
        %v1334 = vpop.f32.mrf.mxu0
        %v1335 = vadd.f32 %v1111, %v1334
        %v1336 = vpop.f32.mrf.mxu0
        %1337 = vmatprep.mubr.f32.mxu0 %v979
        %1338 = vmatmul.mubr.f32.gmra.mxu0 %v978
        %v1339 = vpop.f32.mrf.mxu0
        %v1340 = vadd.f32 %v1116, %v1339
        %v1341 = vpop.f32.mrf.mxu0
        %1342 = vmatprep.mubr.f32.mxu0 %v981
        %1343 = vmatmul.mubr.f32.gmra.mxu0 %v980
        %v1344 = vpop.f32.mrf.mxu0
        %v1345 = vadd.f32 %v1121, %v1344
        %v1346 = vpop.f32.mrf.mxu0
        %1347 = vmatprep.mubr.f32.mxu0 %v983
        %1348 = vmatmul.mubr.f32.gmra.mxu0 %v982
        %v1349 = vpop.f32.mrf.mxu0
        %v1350 = vadd.f32 %v1126, %v1349
        %v1351 = vpop.f32.mrf.mxu0
        %1352 = vmatprep.mubr.f32.mxu0 %v985
        %1353 = vmatmul.mubr.f32.gmra.mxu0 %v984
        %v1354 = vpop.f32.mrf.mxu0
        %v1355 = vadd.f32 %v1131, %v1354
        %v1356 = vpop.f32.mrf.mxu0
        %1357 = vmatprep.mubr.f32.mxu0 %v987
        %1358 = vmatmul.mubr.f32.gmra.mxu0 %v986
        %v1359 = vpop.f32.mrf.mxu0
        %v1360 = vadd.f32 %v1136, %v1359
        %v1361 = vpop.f32.mrf.mxu0
        %1362 = vmatprep.mubr.f32.mxu0 %v989
        %1363 = vmatmul.mubr.f32.gmra.mxu0 %v988
        %v1364 = vpop.f32.mrf.mxu0
        %v1365 = vadd.f32 %v1141, %v1364
        %v1366 = vpop.f32.mrf.mxu0
        %1367 = vmatprep.mubr.f32.mxu0 %v991
        %1368 = vmatmul.mubr.f32.gmra.mxu0 %v990
        %v1369 = vpop.f32.mrf.mxu0
        %v1370 = vadd.f32 %v1146, %v1369
        %v1371 = vpop.f32.mrf.mxu0
        %1372 = vmatprep.mubr.f32.mxu0 %v993
        %1373 = vmatmul.mubr.f32.gmra.mxu0 %v992
        %v1374 = vpop.f32.mrf.mxu0
        %v1375 = vadd.f32 %v1151, %v1374
        %v1376 = vpop.f32.mrf.mxu0
        %1377 = vmatprep.mubr.f32.mxu0 %v995
        %1378 = vmatmul.mubr.f32.gmra.mxu0 %v994
        %v1379 = vpop.f32.mrf.mxu0
        %v1380 = vadd.f32 %v1156, %v1379
        %v1381 = vpop.f32.mrf.mxu0
        %1382 = vmatprep.mubr.f32.mxu0 %v997
        %1383 = vmatmul.mubr.f32.gmra.mxu0 %v996
        %v1384 = vpop.f32.mrf.mxu0
        %v1385 = vadd.f32 %v1161, %v1384
        %v1386 = vpop.f32.mrf.mxu0
        %1387 = vmatprep.mubr.f32.mxu0 %v999
        %1388 = vmatmul.mubr.f32.gmra.mxu0 %v998
        %v1389 = vpop.f32.mrf.mxu0
        %v1390 = vadd.f32 %v1166, %v1389
        %v1391 = vpop.f32.mrf.mxu0
        %1392 = vmatprep.mubr.f32.mxu0 %v1001
        %1393 = vmatmul.mubr.f32.gmra.mxu0 %v1000
        %v1394 = vpop.f32.mrf.mxu0
        %v1395 = vadd.f32 %v1171, %v1394
        %v1396 = vpop.f32.mrf.mxu0
        %1397 = vmatprep.mubr.f32.mxu0 %v1003
        %1398 = vmatmul.mubr.f32.gmra.mxu0 %v1002
        %v1399 = vpop.f32.mrf.mxu0
        %v1400 = vadd.f32 %v1176, %v1399
        %v1401 = vpop.f32.mrf.mxu0
        %1402 = vmatprep.mubr.f32.mxu0 %v1005
        %1403 = vmatmul.mubr.f32.gmra.mxu0 %v1004
        %v1404 = vpop.f32.mrf.mxu0
        %v1405 = vadd.f32 %v1181, %v1404
        %v1406 = vpop.f32.mrf.mxu0
        %1407 = vmatprep.mubr.f32.mxu0 %v1007
        %1408 = vmatmul.mubr.f32.gmra.mxu0 %v1006
        %v1409 = vpop.f32.mrf.mxu0
        %v1410 = vadd.f32 %v1186, %v1409
        %v1411 = vpop.f32.mrf.mxu0
        %1412 = vmatprep.mubr.f32.mxu0 %v1009
        %1413 = vmatmul.mubr.f32.gmra.mxu0 %v1008
        %v1414 = vpop.f32.mrf.mxu0
        %v1415 = vadd.f32 %v1191, %v1414
        %v1416 = vpop.f32.mrf.mxu0
        %1417 = vmatprep.mubr.f32.mxu0 %v1011
        %1418 = vmatmul.mubr.f32.gmra.mxu0 %v1010
        %v1419 = vpop.f32.mrf.mxu0
        %v1420 = vadd.f32 %v1196, %v1419
        %v1421 = vpop.f32.mrf.mxu0
        %1422 = vmatprep.mubr.f32.mxu0 %v1013
        %1423 = vmatmul.mubr.f32.gmra.mxu0 %v1012
        %v1424 = vpop.f32.mrf.mxu0
        %v1425 = vadd.f32 %v1201, %v1424
        %v1426 = vpop.f32.mrf.mxu0
        %1427 = vmatprep.mubr.f32.mxu0 %v1015
        %1428 = vmatmul.mubr.f32.gmra.mxu0 %v1014
        %v1429 = vpop.f32.mrf.mxu0
        %v1430 = vadd.f32 %v1206, %v1429
        %v1431 = vpop.f32.mrf.mxu0
        %1432 = vdwg.mxu0
        %v1433 = vmax.f32 %v1275, 0.0
        %v1434 = vmax.f32 %v1280, 0.0
        %v1435 = vmax.f32 %v1285, 0.0
        %v1436 = vmax.f32 %v1290, 0.0
        %v1437 = vmax.f32 %v1295, 0.0
        %v1438 = vmax.f32 %v1300, 0.0
        %v1439 = vmax.f32 %v1305, 0.0
        %v1440 = vmax.f32 %v1310, 0.0
        %v1441 = vmax.f32 %v1315, 0.0
        %v1442 = vmax.f32 %v1320, 0.0
        %v1443 = vmax.f32 %v1325, 0.0
        %v1444 = vmax.f32 %v1330, 0.0
        %v1445 = vmax.f32 %v1335, 0.0
        %v1446 = vmax.f32 %v1340, 0.0
        %v1447 = vmax.f32 %v1345, 0.0
        %v1448 = vmax.f32 %v1350, 0.0
        %v1449 = vmax.f32 %v1355, 0.0
        %v1450 = vmax.f32 %v1360, 0.0
        %v1451 = vmax.f32 %v1365, 0.0
        %v1452 = vmax.f32 %v1370, 0.0
        %v1453 = vmax.f32 %v1375, 0.0
        %v1454 = vmax.f32 %v1380, 0.0
        %v1455 = vmax.f32 %v1385, 0.0
        %v1456 = vmax.f32 %v1390, 0.0
        %v1457 = vmax.f32 %v1395, 0.0
        %v1458 = vmax.f32 %v1400, 0.0
        %v1459 = vmax.f32 %v1405, 0.0
        %v1460 = vmax.f32 %v1410, 0.0
        %v1461 = vmax.f32 %v1415, 0.0
        %v1462 = vmax.f32 %v1420, 0.0
        %v1463 = vmax.f32 %v1425, 0.0
        %v1464 = vmax.f32 %v1430, 0.0
        %v1465 = vld [vmem:[%s6] sm:$0xff]
        %v1466 = vld [vmem:[%s6 + $0x8] sm:$0xff]
        %v1467 = vld [vmem:[%s6 + $0x10] sm:$0xff]
        %v1468 = vld [vmem:[%s6 + $0x18] sm:$0xff]
        %v1469 = vld [vmem:[%s6 + $0x20] sm:$0xff]
        %v1470 = vld [vmem:[%s6 + $0x28] sm:$0xff]
        %v1471 = vld [vmem:[%s6 + $0x30] sm:$0xff]
        %v1472 = vld [vmem:[%s6 + $0x38] sm:$0xff]
        %v1473 = vld [vmem:[%s6 + $0x40] sm:$0xff]
        %v1474 = vld [vmem:[%s6 + $0x48] sm:$0xff]
        %v1475 = vld [vmem:[%s6 + $0x50] sm:$0xff]
        %v1476 = vld [vmem:[%s6 + $0x58] sm:$0xff]
        %v1477 = vld [vmem:[%s6 + $0x60] sm:$0xff]
        %v1478 = vld [vmem:[%s6 + $0x68] sm:$0xff]
        %v1479 = vld [vmem:[%s6 + $0x70] sm:$0xff]
        %v1480 = vld [vmem:[%s6 + $0x78] sm:$0xff]
        %v1481 = vld [vmem:[%s6 + $0x80] sm:$0xff]
        %v1482 = vld [vmem:[%s6 + $0x88] sm:$0xff]
        %v1483 = vld [vmem:[%s6 + $0x90] sm:$0xff]
        %v1484 = vld [vmem:[%s6 + $0x98] sm:$0xff]
        %v1485 = vld [vmem:[%s6 + $0xa0] sm:$0xff]
        %v1486 = vld [vmem:[%s6 + $0xa8] sm:$0xff]
        %v1487 = vld [vmem:[%s6 + $0xb0] sm:$0xff]
        %v1488 = vld [vmem:[%s6 + $0xb8] sm:$0xff]
        %v1489 = vld [vmem:[%s6 + $0xc0] sm:$0xff]
        %v1490 = vld [vmem:[%s6 + $0xc8] sm:$0xff]
        %v1491 = vld [vmem:[%s6 + $0xd0] sm:$0xff]
        %v1492 = vld [vmem:[%s6 + $0xd8] sm:$0xff]
        %v1493 = vld [vmem:[%s6 + $0xe0] sm:$0xff]
        %v1494 = vld [vmem:[%s6 + $0xe8] sm:$0xff]
        %v1495 = vld [vmem:[%s6 + $0xf0] sm:$0xff]
        %v1496 = vld [vmem:[%s6 + $0xf8] sm:$0xff]
        %v1497 = vld [vmem:[%s6 + $0x100] sm:$0xff]
        %v1498 = vld [vmem:[%s6 + $0x108] sm:$0xff]
        %v1499 = vld [vmem:[%s6 + $0x110] sm:$0xff]
        %v1500 = vld [vmem:[%s6 + $0x118] sm:$0xff]
        %v1501 = vld [vmem:[%s6 + $0x120] sm:$0xff]
        %v1502 = vld [vmem:[%s6 + $0x128] sm:$0xff]
        %v1503 = vld [vmem:[%s6 + $0x130] sm:$0xff]
        %v1504 = vld [vmem:[%s6 + $0x138] sm:$0xff]
        %v1505 = vld [vmem:[%s6 + $0x140] sm:$0xff]
        %v1506 = vld [vmem:[%s6 + $0x148] sm:$0xff]
        %v1507 = vld [vmem:[%s6 + $0x150] sm:$0xff]
        %v1508 = vld [vmem:[%s6 + $0x158] sm:$0xff]
        %v1509 = vld [vmem:[%s6 + $0x160] sm:$0xff]
        %v1510 = vld [vmem:[%s6 + $0x168] sm:$0xff]
        %v1511 = vld [vmem:[%s6 + $0x170] sm:$0xff]
        %v1512 = vld [vmem:[%s6 + $0x178] sm:$0xff]
        %v1513 = vld [vmem:[%s6 + $0x180] sm:$0xff]
        %v1514 = vld [vmem:[%s6 + $0x188] sm:$0xff]
        %v1515 = vld [vmem:[%s6 + $0x190] sm:$0xff]
        %v1516 = vld [vmem:[%s6 + $0x198] sm:$0xff]
        %v1517 = vld [vmem:[%s6 + $0x1a0] sm:$0xff]
        %v1518 = vld [vmem:[%s6 + $0x1a8] sm:$0xff]
        %v1519 = vld [vmem:[%s6 + $0x1b0] sm:$0xff]
        %v1520 = vld [vmem:[%s6 + $0x1b8] sm:$0xff]
        %v1521 = vld [vmem:[%s6 + $0x1c0] sm:$0xff]
        %v1522 = vld [vmem:[%s6 + $0x1c8] sm:$0xff]
        %v1523 = vld [vmem:[%s6 + $0x1d0] sm:$0xff]
        %v1524 = vld [vmem:[%s6 + $0x1d8] sm:$0xff]
        %v1525 = vld [vmem:[%s6 + $0x1e0] sm:$0xff]
        %v1526 = vld [vmem:[%s6 + $0x1e8] sm:$0xff]
        %v1527 = vld [vmem:[%s6 + $0x1f0] sm:$0xff]
        %v1528 = vld [vmem:[%s6 + $0x1f8] sm:$0xff]
        %v1529 = vld [vmem:[%s6 + $0x200] sm:$0xff]
        %v1530 = vld [vmem:[%s6 + $0x208] sm:$0xff]
        %v1531 = vld [vmem:[%s7] sm:$0xff]
        %v1532 = vld [vmem:[%s7 + $0x8] sm:$0xff]
        %v1533 = vld [vmem:[%s7 + $0x10] sm:$0xff]
        %v1534 = vld [vmem:[%s7 + $0x18] sm:$0xff]
        %v1535 = vld [vmem:[%s7 + $0x20] sm:$0xff]
        %v1536 = vld [vmem:[%s7 + $0x28] sm:$0xff]
        %v1537 = vld [vmem:[%s7 + $0x30] sm:$0xff]
        %v1538 = vld [vmem:[%s7 + $0x38] sm:$0xff]
        %v1539 = vld [vmem:[%s7 + $0x40] sm:$0xff]
        %v1540 = vld [vmem:[%s7 + $0x48] sm:$0xff]
        %v1541 = vld [vmem:[%s7 + $0x50] sm:$0xff]
        %v1542 = vld [vmem:[%s7 + $0x58] sm:$0xff]
        %v1543 = vld [vmem:[%s7 + $0x60] sm:$0xff]
        %v1544 = vld [vmem:[%s7 + $0x68] sm:$0xff]
        %v1545 = vld [vmem:[%s7 + $0x70] sm:$0xff]
        %v1546 = vld [vmem:[%s7 + $0x78] sm:$0xff]
        %v1547 = vld [vmem:[%s7 + $0x80] sm:$0xff]
        %v1548 = vld [vmem:[%s7 + $0x88] sm:$0xff]
        %v1549 = vld [vmem:[%s7 + $0x90] sm:$0xff]
        %v1550 = vld [vmem:[%s7 + $0x98] sm:$0xff]
        %v1551 = vld [vmem:[%s7 + $0xa0] sm:$0xff]
        %v1552 = vld [vmem:[%s7 + $0xa8] sm:$0xff]
        %v1553 = vld [vmem:[%s7 + $0xb0] sm:$0xff]
        %v1554 = vld [vmem:[%s7 + $0xb8] sm:$0xff]
        %v1555 = vld [vmem:[%s7 + $0xc0] sm:$0xff]
        %v1556 = vld [vmem:[%s7 + $0xc8] sm:$0xff]
        %v1557 = vld [vmem:[%s7 + $0xd0] sm:$0xff]
        %v1558 = vld [vmem:[%s7 + $0xd8] sm:$0xff]
        %v1559 = vld [vmem:[%s7 + $0xe0] sm:$0xff]
        %v1560 = vld [vmem:[%s7 + $0xe8] sm:$0xff]
        %v1561 = vld [vmem:[%s7 + $0xf0] sm:$0xff]
        %v1562 = vld [vmem:[%s7 + $0xf8] sm:$0xff]
        %v1563 = vld [vmem:[%s7 + $0x100] sm:$0xff]
        %1565 = vset.pattern.permute.xlu0 0
        %1566 = vperm.xlu0 %1565, %v1531
        %v1567 = vpop.permute.xlu0 %1566
        %1570 = vset.pattern.permute.xlu0 0
        %1571 = vperm.xlu0 %1570, %v1532
        %v1572 = vpop.permute.xlu0 %1571
        %1575 = vset.pattern.permute.xlu0 0
        %1576 = vperm.xlu0 %1575, %v1533
        %v1577 = vpop.permute.xlu0 %1576
        %1580 = vset.pattern.permute.xlu0 0
        %1581 = vperm.xlu0 %1580, %v1534
        %v1582 = vpop.permute.xlu0 %1581
        %1585 = vset.pattern.permute.xlu0 0
        %1586 = vperm.xlu0 %1585, %v1535
        %v1587 = vpop.permute.xlu0 %1586
        %1590 = vset.pattern.permute.xlu0 0
        %1591 = vperm.xlu0 %1590, %v1536
        %v1592 = vpop.permute.xlu0 %1591
        %1595 = vset.pattern.permute.xlu0 0
        %1596 = vperm.xlu0 %1595, %v1537
        %v1597 = vpop.permute.xlu0 %1596
        %1600 = vset.pattern.permute.xlu0 0
        %1601 = vperm.xlu0 %1600, %v1538
        %v1602 = vpop.permute.xlu0 %1601
        %1605 = vset.pattern.permute.xlu0 0
        %1606 = vperm.xlu0 %1605, %v1539
        %v1607 = vpop.permute.xlu0 %1606
        %1610 = vset.pattern.permute.xlu0 0
        %1611 = vperm.xlu0 %1610, %v1540
        %v1612 = vpop.permute.xlu0 %1611
        %1615 = vset.pattern.permute.xlu0 0
        %1616 = vperm.xlu0 %1615, %v1541
        %v1617 = vpop.permute.xlu0 %1616
        %1620 = vset.pattern.permute.xlu0 0
        %1621 = vperm.xlu0 %1620, %v1542
        %v1622 = vpop.permute.xlu0 %1621
        %1625 = vset.pattern.permute.xlu0 0
        %1626 = vperm.xlu0 %1625, %v1543
        %v1627 = vpop.permute.xlu0 %1626
        %1630 = vset.pattern.permute.xlu0 0
        %1631 = vperm.xlu0 %1630, %v1544
        %v1632 = vpop.permute.xlu0 %1631
        %1635 = vset.pattern.permute.xlu0 0
        %1636 = vperm.xlu0 %1635, %v1545
        %v1637 = vpop.permute.xlu0 %1636
        %1640 = vset.pattern.permute.xlu0 0
        %1641 = vperm.xlu0 %1640, %v1546
        %v1642 = vpop.permute.xlu0 %1641
        %1645 = vset.pattern.permute.xlu0 0
        %1646 = vperm.xlu0 %1645, %v1547
        %v1647 = vpop.permute.xlu0 %1646
        %1650 = vset.pattern.permute.xlu0 0
        %1651 = vperm.xlu0 %1650, %v1548
        %v1652 = vpop.permute.xlu0 %1651
        %1655 = vset.pattern.permute.xlu0 0
        %1656 = vperm.xlu0 %1655, %v1549
        %v1657 = vpop.permute.xlu0 %1656
        %1660 = vset.pattern.permute.xlu0 0
        %1661 = vperm.xlu0 %1660, %v1550
        %v1662 = vpop.permute.xlu0 %1661
        %1665 = vset.pattern.permute.xlu0 0
        %1666 = vperm.xlu0 %1665, %v1551
        %v1667 = vpop.permute.xlu0 %1666
        %1670 = vset.pattern.permute.xlu0 0
        %1671 = vperm.xlu0 %1670, %v1552
        %v1672 = vpop.permute.xlu0 %1671
        %1675 = vset.pattern.permute.xlu0 0
        %1676 = vperm.xlu0 %1675, %v1553
        %v1677 = vpop.permute.xlu0 %1676
        %1680 = vset.pattern.permute.xlu0 0
        %1681 = vperm.xlu0 %1680, %v1554
        %v1682 = vpop.permute.xlu0 %1681
        %1685 = vset.pattern.permute.xlu0 0
        %1686 = vperm.xlu0 %1685, %v1555
        %v1687 = vpop.permute.xlu0 %1686
        %1690 = vset.pattern.permute.xlu0 0
        %1691 = vperm.xlu0 %1690, %v1556
        %v1692 = vpop.permute.xlu0 %1691
        %1695 = vset.pattern.permute.xlu0 0
        %1696 = vperm.xlu0 %1695, %v1557
        %v1697 = vpop.permute.xlu0 %1696
        %1700 = vset.pattern.permute.xlu0 0
        %1701 = vperm.xlu0 %1700, %v1558
        %v1702 = vpop.permute.xlu0 %1701
        %1705 = vset.pattern.permute.xlu0 0
        %1706 = vperm.xlu0 %1705, %v1559
        %v1707 = vpop.permute.xlu0 %1706
        %1710 = vset.pattern.permute.xlu0 0
        %1711 = vperm.xlu0 %1710, %v1560
        %v1712 = vpop.permute.xlu0 %1711
        %1715 = vset.pattern.permute.xlu0 0
        %1716 = vperm.xlu0 %1715, %v1561
        %v1717 = vpop.permute.xlu0 %1716
        %1720 = vset.pattern.permute.xlu0 0
        %1721 = vperm.xlu0 %1720, %v1562
        %v1722 = vpop.permute.xlu0 %1721
        %1725 = vset.pattern.permute.xlu0 0
        %1726 = vperm.xlu0 %1725, %v1563
        %v1727 = vpop.permute.xlu0 %1726
        %1729 = vmatprep.subr.mxu0 0.0
        %1730 = vmatpush1.msra.mxu0 %v1448
        %1731 = vmatprep.subr.mxu0 0.0
        %1732 = vmatpush1.msra.mxu0 %v1447
        %1733 = vmatprep.subr.mxu0 0.0
        %1734 = vmatpush1.msra.mxu0 %v1446
        %1735 = vmatprep.subr.mxu0 0.0
        %1736 = vmatpush1.msra.mxu0 %v1445
        %1737 = vmatprep.subr.mxu0 0.0
        %1738 = vmatpush1.msra.mxu0 %v1444
        %1739 = vmatprep.subr.mxu0 0.0
        %1740 = vmatpush1.msra.mxu0 %v1443
        %1741 = vmatprep.subr.mxu0 0.0
        %1742 = vmatpush1.msra.mxu0 %v1442
        %1743 = vmatprep.subr.mxu0 0.0
        %1744 = vmatpush1.msra.mxu0 %v1441
        %1745 = vmatprep.subr.mxu0 0.0
        %1746 = vmatpush1.msra.mxu0 %v1440
        %1747 = vmatprep.subr.mxu0 0.0
        %1748 = vmatpush1.msra.mxu0 %v1439
        %1749 = vmatprep.subr.mxu0 0.0
        %1750 = vmatpush1.msra.mxu0 %v1438
        %1751 = vmatprep.subr.mxu0 0.0
        %1752 = vmatpush1.msra.mxu0 %v1437
        %1753 = vmatprep.subr.mxu0 0.0
        %1754 = vmatpush1.msra.mxu0 %v1436
        %1755 = vmatprep.subr.mxu0 0.0
        %1756 = vmatpush1.msra.mxu0 %v1435
        %1757 = vmatprep.subr.mxu0 0.0
        %1758 = vmatpush1.msra.mxu0 %v1434
        %1759 = vmatprep.subr.mxu0 0.0
        %1760 = vmatpush1.msra.mxu0 %v1433
        %1761 = vmatprep.subr.mxu0 0.0
        %1762 = vmatpush2.msra.mxu0 %v1464
        %1763 = vmatprep.subr.mxu0 0.0
        %1764 = vmatpush2.msra.mxu0 %v1463
        %1765 = vmatprep.subr.mxu0 0.0
        %1766 = vmatpush2.msra.mxu0 %v1462
        %1767 = vmatprep.subr.mxu0 0.0
        %1768 = vmatpush2.msra.mxu0 %v1461
        %1769 = vmatprep.subr.mxu0 0.0
        %1770 = vmatpush2.msra.mxu0 %v1460
        %1771 = vmatprep.subr.mxu0 0.0
        %1772 = vmatpush2.msra.mxu0 %v1459
        %1773 = vmatprep.subr.mxu0 0.0
        %1774 = vmatpush2.msra.mxu0 %v1458
        %1775 = vmatprep.subr.mxu0 0.0
        %1776 = vmatpush2.msra.mxu0 %v1457
        %1777 = vmatprep.subr.mxu0 0.0
        %1778 = vmatpush2.msra.mxu0 %v1456
        %1779 = vmatprep.subr.mxu0 0.0
        %1780 = vmatpush2.msra.mxu0 %v1455
        %1781 = vmatprep.subr.mxu0 0.0
        %1782 = vmatpush2.msra.mxu0 %v1454
        %1783 = vmatprep.subr.mxu0 0.0
        %1784 = vmatpush2.msra.mxu0 %v1453
        %1785 = vmatprep.subr.mxu0 0.0
        %1786 = vmatpush2.msra.mxu0 %v1452
        %1787 = vmatprep.subr.mxu0 0.0
        %1788 = vmatpush2.msra.mxu0 %v1451
        %1789 = vmatprep.subr.mxu0 0.0
        %1790 = vmatpush2.msra.mxu0 %v1450
        %1791 = vmatprep.subr.mxu0 0.0
        %1792 = vmatpush2.msra.mxu0 %v1449
        %1793 = vmatprep.mubr.f32.mxu0 %v1466
        %1794 = vmatmul.mubr.f32.gmra.mxu0 %v1465
        %v1795 = vpop.f32.mrf.mxu0
        %v1796 = vadd.f32 %v1567, %v1795
        %v1797 = vpop.f32.mrf.mxu0
        %1798 = vmatprep.mubr.f32.mxu0 %v1468
        %1799 = vmatmul.mubr.f32.gmra.mxu0 %v1467
        %v1800 = vpop.f32.mrf.mxu0
        %v1801 = vadd.f32 %v1572, %v1800
        %v1802 = vpop.f32.mrf.mxu0
        %1803 = vmatprep.mubr.f32.mxu0 %v1470
        %1804 = vmatmul.mubr.f32.gmra.mxu0 %v1469
        %v1805 = vpop.f32.mrf.mxu0
        %v1806 = vadd.f32 %v1577, %v1805
        %v1807 = vpop.f32.mrf.mxu0
        %1808 = vmatprep.mubr.f32.mxu0 %v1472
        %1809 = vmatmul.mubr.f32.gmra.mxu0 %v1471
        %v1810 = vpop.f32.mrf.mxu0
        %v1811 = vadd.f32 %v1582, %v1810
        %v1812 = vpop.f32.mrf.mxu0
        %1813 = vmatprep.mubr.f32.mxu0 %v1474
        %1814 = vmatmul.mubr.f32.gmra.mxu0 %v1473
        %v1815 = vpop.f32.mrf.mxu0
        %v1816 = vadd.f32 %v1587, %v1815
        %v1817 = vpop.f32.mrf.mxu0
        %1818 = vmatprep.mubr.f32.mxu0 %v1476
        %1819 = vmatmul.mubr.f32.gmra.mxu0 %v1475
        %v1820 = vpop.f32.mrf.mxu0
        %v1821 = vadd.f32 %v1592, %v1820
        %v1822 = vpop.f32.mrf.mxu0
        %1823 = vmatprep.mubr.f32.mxu0 %v1478
        %1824 = vmatmul.mubr.f32.gmra.mxu0 %v1477
        %v1825 = vpop.f32.mrf.mxu0
        %v1826 = vadd.f32 %v1597, %v1825
        %v1827 = vpop.f32.mrf.mxu0
        %1828 = vmatprep.mubr.f32.mxu0 %v1480
        %1829 = vmatmul.mubr.f32.gmra.mxu0 %v1479
        %v1830 = vpop.f32.mrf.mxu0
        %v1831 = vadd.f32 %v1602, %v1830
        %v1832 = vpop.f32.mrf.mxu0
        %1833 = vmatprep.mubr.f32.mxu0 %v1482
        %1834 = vmatmul.mubr.f32.gmra.mxu0 %v1481
        %v1835 = vpop.f32.mrf.mxu0
        %v1836 = vadd.f32 %v1607, %v1835
        %v1837 = vpop.f32.mrf.mxu0
        %1838 = vmatprep.mubr.f32.mxu0 %v1484
        %1839 = vmatmul.mubr.f32.gmra.mxu0 %v1483
        %v1840 = vpop.f32.mrf.mxu0
        %v1841 = vadd.f32 %v1612, %v1840
        %v1842 = vpop.f32.mrf.mxu0
        %1843 = vmatprep.mubr.f32.mxu0 %v1486
        %1844 = vmatmul.mubr.f32.gmra.mxu0 %v1485
        %v1845 = vpop.f32.mrf.mxu0
        %v1846 = vadd.f32 %v1617, %v1845
        %v1847 = vpop.f32.mrf.mxu0
        %1848 = vmatprep.mubr.f32.mxu0 %v1488
        %1849 = vmatmul.mubr.f32.gmra.mxu0 %v1487
        %v1850 = vpop.f32.mrf.mxu0
        %v1851 = vadd.f32 %v1622, %v1850
        %v1852 = vpop.f32.mrf.mxu0
        %1853 = vmatprep.mubr.f32.mxu0 %v1490
        %1854 = vmatmul.mubr.f32.gmra.mxu0 %v1489
        %v1855 = vpop.f32.mrf.mxu0
        %v1856 = vadd.f32 %v1627, %v1855
        %v1857 = vpop.f32.mrf.mxu0
        %1858 = vmatprep.mubr.f32.mxu0 %v1492
        %1859 = vmatmul.mubr.f32.gmra.mxu0 %v1491
        %v1860 = vpop.f32.mrf.mxu0
        %v1861 = vadd.f32 %v1632, %v1860
        %v1862 = vpop.f32.mrf.mxu0
        %1863 = vmatprep.mubr.f32.mxu0 %v1494
        %1864 = vmatmul.mubr.f32.gmra.mxu0 %v1493
        %v1865 = vpop.f32.mrf.mxu0
        %v1866 = vadd.f32 %v1637, %v1865
        %v1867 = vpop.f32.mrf.mxu0
        %1868 = vmatprep.mubr.f32.mxu0 %v1496
        %1869 = vmatmul.mubr.f32.gmra.mxu0 %v1495
        %v1870 = vpop.f32.mrf.mxu0
        %v1871 = vadd.f32 %v1642, %v1870
        %v1872 = vpop.f32.mrf.mxu0
        %1873 = vmatprep.mubr.f32.mxu0 %v1498
        %1874 = vmatmul.mubr.f32.gmra.mxu0 %v1497
        %v1875 = vpop.f32.mrf.mxu0
        %v1876 = vadd.f32 %v1647, %v1875
        %v1877 = vpop.f32.mrf.mxu0
        %1878 = vmatprep.mubr.f32.mxu0 %v1500
        %1879 = vmatmul.mubr.f32.gmra.mxu0 %v1499
        %v1880 = vpop.f32.mrf.mxu0
        %v1881 = vadd.f32 %v1652, %v1880
        %v1882 = vpop.f32.mrf.mxu0
        %1883 = vmatprep.mubr.f32.mxu0 %v1502
        %1884 = vmatmul.mubr.f32.gmra.mxu0 %v1501
        %v1885 = vpop.f32.mrf.mxu0
        %v1886 = vadd.f32 %v1657, %v1885
        %v1887 = vpop.f32.mrf.mxu0
        %1888 = vmatprep.mubr.f32.mxu0 %v1504
        %1889 = vmatmul.mubr.f32.gmra.mxu0 %v1503
        %v1890 = vpop.f32.mrf.mxu0
        %v1891 = vadd.f32 %v1662, %v1890
        %v1892 = vpop.f32.mrf.mxu0
        %1893 = vmatprep.mubr.f32.mxu0 %v1506
        %1894 = vmatmul.mubr.f32.gmra.mxu0 %v1505
        %v1895 = vpop.f32.mrf.mxu0
        %v1896 = vadd.f32 %v1667, %v1895
        %v1897 = vpop.f32.mrf.mxu0
        %1898 = vmatprep.mubr.f32.mxu0 %v1508
        %1899 = vmatmul.mubr.f32.gmra.mxu0 %v1507
        %v1900 = vpop.f32.mrf.mxu0
        %v1901 = vadd.f32 %v1672, %v1900
        %v1902 = vpop.f32.mrf.mxu0
        %1903 = vmatprep.mubr.f32.mxu0 %v1510
        %1904 = vmatmul.mubr.f32.gmra.mxu0 %v1509
        %v1905 = vpop.f32.mrf.mxu0
        %v1906 = vadd.f32 %v1677, %v1905
        %v1907 = vpop.f32.mrf.mxu0
        %1908 = vmatprep.mubr.f32.mxu0 %v1512
        %1909 = vmatmul.mubr.f32.gmra.mxu0 %v1511
        %v1910 = vpop.f32.mrf.mxu0
        %v1911 = vadd.f32 %v1682, %v1910
        %v1912 = vpop.f32.mrf.mxu0
        %1913 = vmatprep.mubr.f32.mxu0 %v1514
        %1914 = vmatmul.mubr.f32.gmra.mxu0 %v1513
        %v1915 = vpop.f32.mrf.mxu0
        %v1916 = vadd.f32 %v1687, %v1915
        %v1917 = vpop.f32.mrf.mxu0
        %1918 = vmatprep.mubr.f32.mxu0 %v1516
        %1919 = vmatmul.mubr.f32.gmra.mxu0 %v1515
        %v1920 = vpop.f32.mrf.mxu0
        %v1921 = vadd.f32 %v1692, %v1920
        %v1922 = vpop.f32.mrf.mxu0
        %1923 = vmatprep.mubr.f32.mxu0 %v1518
        %1924 = vmatmul.mubr.f32.gmra.mxu0 %v1517
        %v1925 = vpop.f32.mrf.mxu0
        %v1926 = vadd.f32 %v1697, %v1925
        %v1927 = vpop.f32.mrf.mxu0
        %1928 = vmatprep.mubr.f32.mxu0 %v1520
        %1929 = vmatmul.mubr.f32.gmra.mxu0 %v1519
        %v1930 = vpop.f32.mrf.mxu0
        %v1931 = vadd.f32 %v1702, %v1930
        %v1932 = vpop.f32.mrf.mxu0
        %1933 = vmatprep.mubr.f32.mxu0 %v1522
        %1934 = vmatmul.mubr.f32.gmra.mxu0 %v1521
        %v1935 = vpop.f32.mrf.mxu0
        %v1936 = vadd.f32 %v1707, %v1935
        %v1937 = vpop.f32.mrf.mxu0
        %1938 = vmatprep.mubr.f32.mxu0 %v1524
        %1939 = vmatmul.mubr.f32.gmra.mxu0 %v1523
        %v1940 = vpop.f32.mrf.mxu0
        %v1941 = vadd.f32 %v1712, %v1940
        %v1942 = vpop.f32.mrf.mxu0
        %1943 = vmatprep.mubr.f32.mxu0 %v1526
        %1944 = vmatmul.mubr.f32.gmra.mxu0 %v1525
        %v1945 = vpop.f32.mrf.mxu0
        %v1946 = vadd.f32 %v1717, %v1945
        %v1947 = vpop.f32.mrf.mxu0
        %1948 = vmatprep.mubr.f32.mxu0 %v1528
        %1949 = vmatmul.mubr.f32.gmra.mxu0 %v1527
        %v1950 = vpop.f32.mrf.mxu0
        %v1951 = vadd.f32 %v1722, %v1950
        %v1952 = vpop.f32.mrf.mxu0
        %1953 = vmatprep.mubr.f32.mxu0 %v1530
        %1954 = vmatmul.mubr.f32.gmra.mxu0 %v1529
        %v1955 = vpop.f32.mrf.mxu0
        %v1956 = vadd.f32 %v1727, %v1955
        %v1957 = vpop.f32.mrf.mxu0
        %1958 = vdwg.mxu0
        %v1959 = vld [vmem:[%s406] sm:$0x7]
        %v1960 = vadd.f32 %v1959, %v1796
        %1961 = vst [vmem:[%s395] sm:$0x7] %v1960
        %v1962 = vld [vmem:[%s351] sm:$0xff]
        %v1963 = vld [vmem:[%s351 + $0x8] sm:$0xff]
        %v1964 = vld [vmem:[%s351 + $0x10] sm:$0xff]
        %v1965 = vld [vmem:[%s351 + $0x18] sm:$0xff]
        %v1966 = vld [vmem:[%s351 + $0x20] sm:$0xff]
        %v1967 = vld [vmem:[%s351 + $0x28] sm:$0xff]
        %v1968 = vld [vmem:[%s351 + $0x30] sm:$0xff]
        %v1969 = vld [vmem:[%s351 + $0x38] sm:$0xff]
        %v1970 = vld [vmem:[%s351 + $0x40] sm:$0xff]
        %v1971 = vld [vmem:[%s351 + $0x48] sm:$0xff]
        %v1972 = vld [vmem:[%s351 + $0x50] sm:$0xff]
        %v1973 = vld [vmem:[%s351 + $0x58] sm:$0xff]
        %v1974 = vld [vmem:[%s351 + $0x60] sm:$0xff]
        %v1975 = vld [vmem:[%s351 + $0x68] sm:$0xff]
        %v1976 = vld [vmem:[%s351 + $0x70] sm:$0xff]
        %v1977 = vld [vmem:[%s351 + $0x78] sm:$0xff]
        %v1978 = vld [vmem:[%s351 + $0x80] sm:$0xff]
        %v1979 = vld [vmem:[%s351 + $0x88] sm:$0xff]
        %v1980 = vld [vmem:[%s351 + $0x90] sm:$0xff]
        %v1981 = vld [vmem:[%s351 + $0x98] sm:$0xff]
        %v1982 = vld [vmem:[%s351 + $0xa0] sm:$0xff]
        %v1983 = vld [vmem:[%s351 + $0xa8] sm:$0xff]
        %v1984 = vld [vmem:[%s351 + $0xb0] sm:$0xff]
        %v1985 = vld [vmem:[%s351 + $0xb8] sm:$0xff]
        %v1986 = vld [vmem:[%s351 + $0xc0] sm:$0xff]
        %v1987 = vld [vmem:[%s351 + $0xc8] sm:$0xff]
        %v1988 = vld [vmem:[%s351 + $0xd0] sm:$0xff]
        %v1989 = vld [vmem:[%s351 + $0xd8] sm:$0xff]
        %v1990 = vld [vmem:[%s351 + $0xe0] sm:$0xff]
        %v1991 = vld [vmem:[%s351 + $0xe8] sm:$0xff]
        %v1992 = vld [vmem:[%s351 + $0xf0] sm:$0xff]
        %v1993 = vld [vmem:[%s351 + $0xf8] sm:$0xff]
        %v1994 = vadd.f32 %v1962, %v1801
        %v1995 = vadd.f32 %v1963, %v1806
        %v1996 = vadd.f32 %v1964, %v1811
        %v1997 = vadd.f32 %v1965, %v1816
        %v1998 = vadd.f32 %v1966, %v1821
        %v1999 = vadd.f32 %v1967, %v1826
        %v2000 = vadd.f32 %v1968, %v1831
        %v2001 = vadd.f32 %v1969, %v1836
        %v2002 = vadd.f32 %v1970, %v1841
        %v2003 = vadd.f32 %v1971, %v1846
        %v2004 = vadd.f32 %v1972, %v1851
        %v2005 = vadd.f32 %v1973, %v1856
        %v2006 = vadd.f32 %v1974, %v1861
        %v2007 = vadd.f32 %v1975, %v1866
        %v2008 = vadd.f32 %v1976, %v1871
        %v2009 = vadd.f32 %v1977, %v1876
        %v2010 = vadd.f32 %v1978, %v1881
        %v2011 = vadd.f32 %v1979, %v1886
        %v2012 = vadd.f32 %v1980, %v1891
        %v2013 = vadd.f32 %v1981, %v1896
        %v2014 = vadd.f32 %v1982, %v1901
        %v2015 = vadd.f32 %v1983, %v1906
        %v2016 = vadd.f32 %v1984, %v1911
        %v2017 = vadd.f32 %v1985, %v1916
        %v2018 = vadd.f32 %v1986, %v1921
        %v2019 = vadd.f32 %v1987, %v1926
        %v2020 = vadd.f32 %v1988, %v1931
        %v2021 = vadd.f32 %v1989, %v1936
        %v2022 = vadd.f32 %v1990, %v1941
        %v2023 = vadd.f32 %v1991, %v1946
        %v2024 = vadd.f32 %v1992, %v1951
        %v2025 = vadd.f32 %v1993, %v1956
        %v2026 = vmul.f32 %v1994, %v1994
        %v2027 = vmul.f32 %v1995, %v1995
        %v2028 = vmul.f32 %v1996, %v1996
        %v2029 = vmul.f32 %v1997, %v1997
        %v2030 = vmul.f32 %v1998, %v1998
        %v2031 = vmul.f32 %v1999, %v1999
        %v2032 = vmul.f32 %v2000, %v2000
        %v2033 = vmul.f32 %v2001, %v2001
        %v2034 = vmul.f32 %v2002, %v2002
        %v2035 = vmul.f32 %v2003, %v2003
        %v2036 = vmul.f32 %v2004, %v2004
        %v2037 = vmul.f32 %v2005, %v2005
        %v2038 = vmul.f32 %v2006, %v2006
        %v2039 = vmul.f32 %v2007, %v2007
        %v2040 = vmul.f32 %v2008, %v2008
        %v2041 = vmul.f32 %v2009, %v2009
        %v2042 = vmul.f32 %v2010, %v2010
        %v2043 = vmul.f32 %v2011, %v2011
        %v2044 = vmul.f32 %v2012, %v2012
        %v2045 = vmul.f32 %v2013, %v2013
        %v2046 = vmul.f32 %v2014, %v2014
        %v2047 = vmul.f32 %v2015, %v2015
        %v2048 = vmul.f32 %v2016, %v2016
        %v2049 = vmul.f32 %v2017, %v2017
        %v2050 = vmul.f32 %v2018, %v2018
        %v2051 = vmul.f32 %v2019, %v2019
        %v2052 = vmul.f32 %v2020, %v2020
        %v2053 = vmul.f32 %v2021, %v2021
        %v2054 = vmul.f32 %v2022, %v2022
        %v2055 = vmul.f32 %v2023, %v2023
        %v2056 = vmul.f32 %v2024, %v2024
        %v2057 = vmul.f32 %v2025, %v2025
        %v2058 = vadd.f32 %v2026, %v2027
        %v2059 = vadd.f32 %v2058, %v2028
        %v2060 = vadd.f32 %v2059, %v2029
        %v2061 = vadd.f32 %v2060, %v2030
        %v2062 = vadd.f32 %v2061, %v2031
        %v2063 = vadd.f32 %v2062, %v2032
        %v2064 = vadd.f32 %v2063, %v2033
        %v2065 = vadd.f32 %v2064, %v2034
        %v2066 = vadd.f32 %v2065, %v2035
        %v2067 = vadd.f32 %v2066, %v2036
        %v2068 = vadd.f32 %v2067, %v2037
        %v2069 = vadd.f32 %v2068, %v2038
        %v2070 = vadd.f32 %v2069, %v2039
        %v2071 = vadd.f32 %v2070, %v2040
        %v2072 = vadd.f32 %v2071, %v2041
        %v2073 = vadd.f32 %v2072, %v2042
        %v2074 = vadd.f32 %v2073, %v2043
        %v2075 = vadd.f32 %v2074, %v2044
        %v2076 = vadd.f32 %v2075, %v2045
        %v2077 = vadd.f32 %v2076, %v2046
        %v2078 = vadd.f32 %v2077, %v2047
        %v2079 = vadd.f32 %v2078, %v2048
        %v2080 = vadd.f32 %v2079, %v2049
        %v2081 = vadd.f32 %v2080, %v2050
        %v2082 = vadd.f32 %v2081, %v2051
        %v2083 = vadd.f32 %v2082, %v2052
        %v2084 = vadd.f32 %v2083, %v2053
        %v2085 = vadd.f32 %v2084, %v2054
        %v2086 = vadd.f32 %v2085, %v2055
        %v2087 = vadd.f32 %v2086, %v2056
        %v2088 = vadd.f32 %v2087, %v2057
        %v2089 = vrot.slane %v2088, 4
        %v2090 = vadd.f32 %v2088, %v2089
        %v2091 = vrot.slane %v2090, 2
        %v2092 = vadd.f32 %v2090, %v2091
        %v2093 = vrot.slane %v2092, 1
        %v2094 = vadd.f32 %v2092, %v2093
        %v2095 = vrsqrt.pop %v2094
        %v2096 = vmul.f32 %v1994, %v2095
        %v2097 = vmul.f32 %v1995, %v2095
        %v2098 = vmul.f32 %v1996, %v2095
        %v2099 = vmul.f32 %v1997, %v2095
        %v2100 = vmul.f32 %v1998, %v2095
        %v2101 = vmul.f32 %v1999, %v2095
        %v2102 = vmul.f32 %v2000, %v2095
        %v2103 = vmul.f32 %v2001, %v2095
        %v2104 = vmul.f32 %v2002, %v2095
        %v2105 = vmul.f32 %v2003, %v2095
        %v2106 = vmul.f32 %v2004, %v2095
        %v2107 = vmul.f32 %v2005, %v2095
        %v2108 = vmul.f32 %v2006, %v2095
        %v2109 = vmul.f32 %v2007, %v2095
        %v2110 = vmul.f32 %v2008, %v2095
        %v2111 = vmul.f32 %v2009, %v2095
        %v2112 = vmul.f32 %v2010, %v2095
        %v2113 = vmul.f32 %v2011, %v2095
        %v2114 = vmul.f32 %v2012, %v2095
        %v2115 = vmul.f32 %v2013, %v2095
        %v2116 = vmul.f32 %v2014, %v2095
        %v2117 = vmul.f32 %v2015, %v2095
        %v2118 = vmul.f32 %v2016, %v2095
        %v2119 = vmul.f32 %v2017, %v2095
        %v2120 = vmul.f32 %v2018, %v2095
        %v2121 = vmul.f32 %v2019, %v2095
        %v2122 = vmul.f32 %v2020, %v2095
        %v2123 = vmul.f32 %v2021, %v2095
        %v2124 = vmul.f32 %v2022, %v2095
        %v2125 = vmul.f32 %v2023, %v2095
        %v2126 = vmul.f32 %v2024, %v2095
        %v2127 = vmul.f32 %v2025, %v2095
        %2128 = vst [vmem:[%s402] sm:$0xff] %v2096
        %2129 = vst [vmem:[%s402 + $0x8] sm:$0xff] %v2097
        %2130 = vst [vmem:[%s402 + $0x10] sm:$0xff] %v2098
        %2131 = vst [vmem:[%s402 + $0x18] sm:$0xff] %v2099
        %2132 = vst [vmem:[%s402 + $0x20] sm:$0xff] %v2100
        %2133 = vst [vmem:[%s402 + $0x28] sm:$0xff] %v2101
        %2134 = vst [vmem:[%s402 + $0x30] sm:$0xff] %v2102
        %2135 = vst [vmem:[%s402 + $0x38] sm:$0xff] %v2103
        %2136 = vst [vmem:[%s402 + $0x40] sm:$0xff] %v2104
        %2137 = vst [vmem:[%s402 + $0x48] sm:$0xff] %v2105
        %2138 = vst [vmem:[%s402 + $0x50] sm:$0xff] %v2106
        %2139 = vst [vmem:[%s402 + $0x58] sm:$0xff] %v2107
        %2140 = vst [vmem:[%s402 + $0x60] sm:$0xff] %v2108
        %2141 = vst [vmem:[%s402 + $0x68] sm:$0xff] %v2109
        %2142 = vst [vmem:[%s402 + $0x70] sm:$0xff] %v2110
        %2143 = vst [vmem:[%s402 + $0x78] sm:$0xff] %v2111
        %2144 = vst [vmem:[%s402 + $0x80] sm:$0xff] %v2112
        %2145 = vst [vmem:[%s402 + $0x88] sm:$0xff] %v2113
        %2146 = vst [vmem:[%s402 + $0x90] sm:$0xff] %v2114
        %2147 = vst [vmem:[%s402 + $0x98] sm:$0xff] %v2115
        %2148 = vst [vmem:[%s402 + $0xa0] sm:$0xff] %v2116
        %2149 = vst [vmem:[%s402 + $0xa8] sm:$0xff] %v2117
        %2150 = vst [vmem:[%s402 + $0xb0] sm:$0xff] %v2118
        %2151 = vst [vmem:[%s402 + $0xb8] sm:$0xff] %v2119
        %2152 = vst [vmem:[%s402 + $0xc0] sm:$0xff] %v2120
        %2153 = vst [vmem:[%s402 + $0xc8] sm:$0xff] %v2121
        %2154 = vst [vmem:[%s402 + $0xd0] sm:$0xff] %v2122
        %2155 = vst [vmem:[%s402 + $0xd8] sm:$0xff] %v2123
        %2156 = vst [vmem:[%s402 + $0xe0] sm:$0xff] %v2124
        %2157 = vst [vmem:[%s402 + $0xe8] sm:$0xff] %v2125
        %2158 = vst [vmem:[%s402 + $0xf0] sm:$0xff] %v2126
        %2159 = vst [vmem:[%s402 + $0xf8] sm:$0xff] %v2127
        %s2160 = sand.u32 %s217, 1
        %s2161 = scalar_lea.sflag [#allocation4], %s2160
        %s2162 = sand.u32 %s217, 1
        %s2163 = smul.addr %s2162, 4
        %s2164 = scalar_lea.vmem [#allocation8], %s2163
        %s2165 = sand.u32 %s243, 1
        %s2166 = scalar_lea.sflag [#allocation10], %s2165
        %s2167 = sand.u32 %s243, 1
        %s2168 = smul.addr %s2167, 256
        %s2169 = scalar_lea.vmem [#allocation9], %s2168
        // Predicated region
        $region65: #{tpu_custom_call.1} parent=51 // pred_check
          %p2170 = pneg %p227
        $region66: #{tpu_custom_call.1} parent=51 // pred_check_branch
          %2172 = sbr.rel (%p2170) target = $region68
        $region67: #{tpu_custom_call.1} parent=51 // pred_region
          %s2174 = ssub.s32 64, 64
          %2175 = vsyncadd %s2161, %s2174
          %s2176 = smul.addr %s31, 64
          %s2177 = scalar_lea.hbm %s8, %s2176
          %s2179 = sshll.u32 %s2164, 4
          %s2180 = int_to_ptr.vmem [resolvable:$true] %s2179
          %2182 = dma.vmem_to_hbm [thread:$0]  %s2180, 64, %s2177, %s2161
        $region68: #{tpu_custom_call.1} parent=51 // pred_fallthru
          _
        // Predicated region
        $region69: #{tpu_custom_call.1} parent=51 // pred_check
          %p2183 = pneg %p253
        $region70: #{tpu_custom_call.1} parent=51 // pred_check_branch
          %2185 = sbr.rel (%p2183) target = $region72
        $region71: #{tpu_custom_call.1} parent=51 // pred_region
          %s2187 = ssub.s32 4096, 4096
          %2188 = vsyncadd %s2166, %s2187
          %s2189 = smul.addr %s31, 128
          %s2190 = scalar_lea.hbm %s9, %s2189
          %s2191 = sshll.u32 %s2169, 4
          %s2192 = int_to_ptr.vmem [resolvable:$true] %s2191
          %2197 = dma.vmem_to_hbm [thread:$0]  %s2192, 4096, %s2190, %s2166, 128, 256, 8
        $region72: #{tpu_custom_call.1} parent=51 // pred_fallthru
          _
      $region52: #{tpu_custom_call.1} parent=5 // pred_fallthru
        _
      %p2198 = scmp.le.s32.totalorder 2, %s26
      // Predicated region
      $region73: #{tpu_custom_call.1} parent=5 // pred_check
        %p2199 = pneg %p2198
      $region74: #{tpu_custom_call.1} parent=5 // pred_check_branch
        %2201 = sbr.rel (%p2199) target = $region76
      $region75: #{tpu_custom_call.1} parent=5 // pred_region
        %s2202 = ssub.s32 %s26, 2
        // Predicated region
        $region77: #{tpu_custom_call.1} parent=75 // pred_check
          %p2203 = pneg %p233
        $region78: #{tpu_custom_call.1} parent=75 // pred_check_branch
          %2205 = sbr.rel (%p2203) target = $region80
        $region79: #{tpu_custom_call.1} parent=75 // pred_region
          %s2206 = sand.u32 %s218, 1
          %s2207 = scalar_lea.sflag [#allocation4], %s2206
          %s2208 = sand.u32 %s218, 1
          %s2209 = smul.addr %s2208, 4
          %s2210 = scalar_lea.vmem [#allocation8], %s2209
          %2211 = dma.done %s2207, 64
        $region80: #{tpu_custom_call.1} parent=75 // pred_fallthru
          _
        // Predicated region
        $region81: #{tpu_custom_call.1} parent=75 // pred_check
          %p2212 = pneg %p259
        $region82: #{tpu_custom_call.1} parent=75 // pred_check_branch
          %2214 = sbr.rel (%p2212) target = $region84
        $region83: #{tpu_custom_call.1} parent=75 // pred_region
          %s2215 = sand.u32 %s244, 1
          %s2216 = scalar_lea.sflag [#allocation10], %s2215
          %s2217 = sand.u32 %s244, 1
          %s2218 = smul.addr %s2217, 256
          %s2219 = scalar_lea.vmem [#allocation9], %s2218
          %2220 = dma.done %s2216, 4096
        $region84: #{tpu_custom_call.1} parent=75 // pred_fallthru
          _
      $region76: #{tpu_custom_call.1} parent=5 // pred_fallthru
        _
    $region6: #{tpu_custom_call.1} parent=1 // loop_footer
      %s30 = sadd.s32 1, %s26
    $region7: #{tpu_custom_call.1} parent=1 // loop_footer_branch
      %25 = sbr.rel target = $region3
    $region8: #{tpu_custom_call.1} parent=1 // loop_exit
      _
    %2221 = vsyncpa [#allocation3], 1
    %s2222 = scalar_lea.sflag [#allocation3], 1
    %2223 = vsyncpa %s2222, 1
    %2224 = vsyncpa [#allocation6], 1
    %2225 = vsyncpa [#allocation4], 1
    %s2226 = scalar_lea.sflag [#allocation4], 1
    %2227 = vsyncpa %s2226, 1
    %2228 = vsyncpa [#allocation10], 1
    %s2229 = scalar_lea.sflag [#allocation10], 1
    %2230 = vsyncpa %s2229, 1

</llo_original>
